<compile_context>
chip_gen: v7x
topology: tpu7x:2x2x1
jax: 0.10.0
libtpu: 0.0.40
codegen_flags: <defaults>
</compile_context>

<pallas_src>
import functools
import math

import jax
import jax.numpy as jnp
from jax.experimental import pallas as pl
from jax.experimental.pallas import tpu as pltpu


# ----------------------------------------------------------------------------- kernel

def _layer_kernel(
        x_in_ref,      # (N, input_size) f32           -- constant across grid
        emb_w_ref,     # (input_size, dm) bf16          -- constant across grid
        gp_ref,        # (3, dm) f32: emb_b, ln_g, ln_b -- constant across grid
        wqkv_ref,      # (dm, 3*dm) bf16                -- per layer
        wo_ref,        # (dm, dm)   bf16                -- per layer
        ffw1_ref,      # (dm, dm)   bf16                -- per layer
        ffw2_ref,      # (dm, dm)   bf16                -- per layer
        coef_ref,      # (N, N)     bf16 (pre-permuted) -- per layer
        lp_ref,        # (12, dm) f32 packed biases/LN  -- per layer
        o_ref,         # (N, dm) f32 output
        x_sc,          # (N, dm) f32 VMEM carry
        *, num_heads):
    """One encoder layer per grid step; activation carried in VMEM scratch."""
    l = pl.program_id(0)
    bf16 = jnp.bfloat16

    def layernorm(v, g, b):
        # nn.LayerNorm over last dim, eps=1e-5, biased variance.
        # var = E[x^2] - mean^2  -> mean and 2nd moment reductions are independent.
        m = jnp.mean(v, axis=-1, keepdims=True)
        m2 = jnp.mean(v * v, axis=-1, keepdims=True)
        return (v - m) * jax.lax.rsqrt(m2 - m * m + 1e-5) * g + b

    # ---- embedding + initial LayerNorm, only on the first grid step ----
    @pl.when(l == 0)
    def _():
        gp = gp_ref[...]
        xe = jnp.dot(x_in_ref[...].astype(bf16), emb_w_ref[...],
                     preferred_element_type=jnp.float32) + gp[0:1]
        x_sc[...] = layernorm(xe, gp[1:2], gp[2:3])

    x = x_sc[...]
    residual = x                        # outer residual of MySelfAttentionNet.forward
    lp = lp_ref[...]

    N, dm = x.shape
    H = num_heads
    dh = dm // H
    scale = 1.0 / math.sqrt(dh)

    # ---- multi-head self-attention (fused QKV, single output projection) ----
    qkv = jnp.dot(x.astype(bf16), wqkv_ref[...],
                  preferred_element_type=jnp.float32)
    q = (qkv[:, 0:dm] + lp[0:1]).astype(bf16)
    k = (qkv[:, dm:2 * dm] + lp[1:2]).astype(bf16)
    v = (qkv[:, 2 * dm:3 * dm] + lp[2:3]).astype(bf16)

    ctx_heads = []
    for h in range(H):                  # H is a small python int -> static unroll
        qh = q[:, h * dh:(h + 1) * dh]
        kh = k[:, h * dh:(h + 1) * dh]
        vh = v[:, h * dh:(h + 1) * dh]
        # scores = qh @ kh^T (contract last dims; no explicit transpose)
        s = jax.lax.dot_general(qh, kh, (((1,), (1,)), ((), ())),
                                preferred_element_type=jnp.float32) * scale
        s = s - jnp.max(s, axis=-1, keepdims=True)
        p = jnp.exp(s)
        p = p / jnp.sum(p, axis=-1, keepdims=True)     # exact reciprocal (review)
        ctx_heads.append(jnp.dot(p.astype(bf16), vh,
                                 preferred_element_type=jnp.float32))
    ctx = jnp.concatenate(ctx_heads, axis=-1)          # (N, dm), one lane concat
    attn = jnp.dot(ctx.astype(bf16), wo_ref[...],
                   preferred_element_type=jnp.float32) + lp[3:4]
    x = layernorm(x + attn, lp[6:7], lp[7:8])          # norm1

    # ---- feed forward (Linear -> ReLU -> Linear) ----
    h1 = jnp.dot(x.astype(bf16), ffw1_ref[...],
                 preferred_element_type=jnp.float32) + lp[4:5]
    h1 = jnp.maximum(h1, 0.0)
    ff = jnp.dot(h1.astype(bf16), ffw2_ref[...],
                 preferred_element_type=jnp.float32) + lp[5:6]
    x = layernorm(x + ff, lp[8:9], lp[9:10])           # norm2

    # ---- self-expression: sort/unsort folded into the pre-permuted coefficient ----
    se = jnp.dot(coef_ref[...], x.astype(bf16),
                 preferred_element_type=jnp.float32)
    x = layernorm(x + se, lp[10:11], lp[11:12])        # norm3

    x = x + residual
    x_sc[...] = x

    @pl.when(l == pl.num_programs(0) - 1)
    def _():
        o_ref[...] = x


# ----------------------------------------------------------------------------- wrapper

@functools.partial(jax.jit, static_argnames=("num_heads",))
def forward(packed, x, *, num_heads):
    """MySelfAttentionNet.forward — one pallas_call with grid over layers."""
    N, in_dim = x.shape
    dm = packed["emb_w"].shape[1]
    L = packed["wqkv"].shape[0]

    kernel = functools.partial(_layer_kernel, num_heads=num_heads)
    return pl.pallas_call(
        kernel,
        grid=(L,),
        in_specs=[
            pl.BlockSpec((N, in_dim), lambda l: (0, 0)),          # x (resident)
            pl.BlockSpec((in_dim, dm), lambda l: (0, 0)),         # emb_w
            pl.BlockSpec((3, dm), lambda l: (0, 0)),              # packed globals
            pl.BlockSpec((None, dm, 3 * dm), lambda l: (l, 0, 0)),  # wqkv[l]
            pl.BlockSpec((None, dm, dm), lambda l: (l, 0, 0)),      # wo[l]
            pl.BlockSpec((None, dm, dm), lambda l: (l, 0, 0)),      # ffw1[l]
            pl.BlockSpec((None, dm, dm), lambda l: (l, 0, 0)),      # ffw2[l]
            pl.BlockSpec((None, N, N), lambda l: (l, 0, 0)),        # coef'[l]
            pl.BlockSpec((None, 12, dm), lambda l: (l, 0, 0)),      # packed biases/LN[l]
        ],
        out_specs=pl.BlockSpec((N, dm), lambda l: (0, 0)),
        out_shape=jax.ShapeDtypeStruct((N, dm), jnp.float32),
        scratch_shapes=[pltpu.VMEM((N, dm), jnp.float32)],         # carried activation
        compiler_params=pltpu.CompilerParams(
            dimension_semantics=("arbitrary",)),                   # sequential layers
    )(x, packed["emb_w"], packed["gparams"], packed["wqkv"], packed["wo"],
      packed["ffw1"], packed["ffw2"], packed["coef"], packed["lparams"])


def pack_params(params, y_labels):
    """One-time packing: bf16 weights, folded coefficient permutation, and the
    small per-layer bias/LN vectors consolidated into a single array."""
    # Fold SelfExpressionLayer.class_forward's sort/unsort into the coefficient:
    #   X_restored[i] = sum_j C[inv[i], inv[j]] X[j],  inv = argsort(argsort(y)).
    inv = jnp.argsort(jnp.argsort(y_labels))
    coef_perm = params["coef"][:, inv, :][:, :, inv].astype(jnp.bfloat16)

    gparams = jnp.stack([params["emb_b"], params["ln_g"], params["ln_b"]],
                        axis=0).astype(jnp.float32)                 # (3, dm)
    bq, bk, bv = jnp.split(params["bqkv"], 3, axis=1)                # each (L, dm)
    lparams = jnp.stack(
        [bq, bk, bv, params["bo"], params["ffb1"], params["ffb2"],
         params["n1_g"], params["n1_b"], params["n2_g"], params["n2_b"],
         params["n3_g"], params["n3_b"]], axis=1).astype(jnp.float32)  # (L, 12, dm)

    return dict(
        emb_w=params["emb_w"].astype(jnp.bfloat16),
        gparams=gparams,
        wqkv=params["wqkv"].astype(jnp.bfloat16),
        wo=params["wo"].astype(jnp.bfloat16),
        ffw1=params["ffw1"].astype(jnp.bfloat16),
        ffw2=params["ffw2"].astype(jnp.bfloat16),
        coef=coef_perm,
        lparams=lparams,
    )


# ----------------------------------------------------------------------------- reference (pure JAX, explicit sort/unsort, same bf16 MXU inputs)

def reference_forward(params, x, y, num_heads):
    bf = jnp.bfloat16

    def ln(v, g, b):
        m = jnp.mean(v, -1, keepdims=True)
        m2 = jnp.mean(v * v, -1, keepdims=True)
        return (v - m) * jax.lax.rsqrt(m2 - m * m + 1e-5) * g + b

    x = jnp.dot(x.astype(bf), params["emb_w"].astype(bf),
                preferred_element_type=jnp.float32) + params["emb_b"]
    x = ln(x, params["ln_g"], params["ln_b"])
    N, dm = x.shape
    H = num_heads
    dh = dm // H
    scale = 1.0 / math.sqrt(dh)
    L = params["wo"].shape[0]
    for l in range(L):
        residual = x
        qkv = jnp.dot(x.astype(bf), params["wqkv"][l].astype(bf),
                      preferred_element_type=jnp.float32) + params["bqkv"][l]
        q, k, v = qkv[:, :dm], qkv[:, dm:2 * dm], qkv[:, 2 * dm:]
        qh = q.astype(bf).reshape(N, H, dh).transpose(1, 0, 2)
        kh = k.astype(bf).reshape(N, H, dh).transpose(1, 0, 2)
        vh = v.astype(bf).reshape(N, H, dh).transpose(1, 0, 2)
        s = jnp.einsum("hnd,hmd->hnm", qh, kh,
                       preferred_element_type=jnp.float32) * scale
        s = s - jnp.max(s, -1, keepdims=True)
        p = jnp.exp(s)
        p = p / jnp.sum(p, -1, keepdims=True)
        ctx = jnp.einsum("hnm,hmd->hnd", p.astype(bf), vh,
                         preferred_element_type=jnp.float32)
        ctx = ctx.transpose(1, 0, 2).reshape(N, dm)
        attn = jnp.dot(ctx.astype(bf), params["wo"][l].astype(bf),
                       preferred_element_type=jnp.float32) + params["bo"][l]
        x = ln(x + attn, params["n1_g"][l], params["n1_b"][l])
        h1 = jnp.maximum(jnp.dot(x.astype(bf), params["ffw1"][l].astype(bf),
                                 preferred_element_type=jnp.float32)
                         + params["ffb1"][l], 0.0)
        ff = jnp.dot(h1.astype(bf), params["ffw2"][l].astype(bf),
                     preferred_element_type=jnp.float32) + params["ffb2"][l]
        x = ln(x + ff, params["n2_g"][l], params["n2_b"][l])
        # explicit sort / self-expression / unsort (as in the PyTorch module)
        idx = jnp.argsort(y)
        xs = x[idx]
        zx = jnp.dot(params["coef"][l].astype(bf), xs.astype(bf),
                     preferred_element_type=jnp.float32)
        xr = zx[jnp.argsort(idx)]
        x = ln(x + xr, params["n3_g"][l], params["n3_b"][l])
        x = x + residual
    return x


# ----------------------------------------------------------------------------- params

def init_params(key, input_size, d_model, num_layers, class_n, weight_c):
    def dense(k, fan_in, fan_out):
        kw, kb = jax.random.split(k)
        lim = 1.0 / math.sqrt(fan_in)
        w = jax.random.uniform(kw, (fan_in, fan_out), jnp.float32, -lim, lim)
        b = jax.random.uniform(kb, (fan_out,), jnp.float32, -lim, lim)
        return w, b

    keys = jax.random.split(key, 1 + num_layers)
    emb_w, emb_b = dense(keys[0], input_size, d_model)
    d_ff = d_model  # MySelfAttentionNet passes d_model as d_ff

    wqkv, bqkv, wo, bo = [], [], [], []
    ffw1, ffb1, ffw2, ffb2, coef = [], [], [], [], []
    for i in range(num_layers):
        lk = jax.random.split(keys[1 + i], 7)
        wq, bq = dense(lk[0], d_model, d_model)
        wk, bk = dense(lk[1], d_model, d_model)
        wv, bv = dense(lk[2], d_model, d_model)
        wqkv.append(jnp.concatenate([wq, wk, wv], axis=1))   # fused QKV weight
        bqkv.append(jnp.concatenate([bq, bk, bv], axis=0))
        w, b = dense(lk[3], d_model, d_model); wo.append(w); bo.append(b)
        w, b = dense(lk[4], d_model, d_ff);    ffw1.append(w); ffb1.append(b)
        w, b = dense(lk[5], d_ff, d_model);    ffw2.append(w); ffb2.append(b)
        coef.append(weight_c * jax.random.normal(lk[6], (class_n, class_n), jnp.float32))

    ones = jnp.ones((num_layers, d_model), jnp.float32)
    zeros = jnp.zeros((num_layers, d_model), jnp.float32)
    return {
        "emb_w": emb_w, "emb_b": emb_b,
        "ln_g": jnp.ones((d_model,), jnp.float32),
        "ln_b": jnp.zeros((d_model,), jnp.float32),
        "wqkv": jnp.stack(wqkv), "bqkv": jnp.stack(bqkv),
        "wo": jnp.stack(wo), "bo": jnp.stack(bo),
        "ffw1": jnp.stack(ffw1), "ffb1": jnp.stack(ffb1),
        "ffw2": jnp.stack(ffw2), "ffb2": jnp.stack(ffb2),
        "n1_g": ones, "n1_b": zeros,
        "n2_g": ones, "n2_b": zeros,
        "n3_g": ones, "n3_b": zeros,
        "coef": jnp.stack(coef),
    }


# ----------------------------------------------------------------------------- main

if __name__ == "__main__":
    input_size = 8
    d_model = 32
    num_heads = 4
    num_layers = 2
    class_output_dim = 4
    batch_size = 4
    weight_c = 0.1
    N = class_output_dim * batch_size   # rows seen by the self-expression layer

    key = jax.random.PRNGKey(0)
    kx, ky, kp = jax.random.split(key, 3)

    x = jax.random.normal(kx, (N, input_size), jnp.float32)
    # class labels (the `y` argument), shuffled to exercise the sort/unsort fold
    y = jax.random.permutation(ky, jnp.repeat(jnp.arange(class_output_dim), batch_size))

    params = init_params(kp, input_size, d_model, num_layers, N, weight_c)
    # Packing (bf16 cast, coefficient permutation fold, small-param consolidation)
    # runs ONCE, outside the per-call jit path.
    packed = pack_params(params, y)

    out = forward(packed, x, num_heads=num_heads)
    out = jax.block_until_ready(out)

    assert out.shape == (N, d_model)
    assert bool(jnp.all(jnp.isfinite(out)))

    ref = reference_forward(params, x, y, num_heads)
    max_diff = float(jnp.max(jnp.abs(out - ref)))
    # bf16 MXU inputs are mirrored in the reference; remaining divergence is
    # f32 accumulation order + exp implementation, well inside 5e-3.
    assert max_diff < 5e-3, f"kernel vs reference max abs diff {max_diff}"

    print("KERNEL_OK")
</pallas_src>

<mosaic_0001>
module attributes {stable_mosaic.version = 11 : i64} {
  func.func @_layer_kernel(%arg0: i32, %arg1: memref<16x8xf32, #tpu.memory_space<vmem>>, %arg2: memref<8x32xbf16, #tpu.memory_space<vmem>>, %arg3: memref<3x32xf32, #tpu.memory_space<vmem>>, %arg4: memref<1x32x96xbf16, #tpu.memory_space<vmem>>, %arg5: memref<1x32x32xbf16, #tpu.memory_space<vmem>>, %arg6: memref<1x32x32xbf16, #tpu.memory_space<vmem>>, %arg7: memref<1x32x32xbf16, #tpu.memory_space<vmem>>, %arg8: memref<1x16x16xbf16, #tpu.memory_space<vmem>>, %arg9: memref<1x12x32xf32, #tpu.memory_space<vmem>>, %arg10: memref<16x32xf32, #tpu.memory_space<vmem>>, %arg11: memref<16x32xf32, #tpu.memory_space<vmem>>) attributes {dimension_semantics = [#tpu.dimension_semantics<arbitrary>], iteration_bounds = array<i64: 2>, scalar_prefetch = 0 : i64, scratch_operands = 1 : i64, tpu.core_type = #tpu.core_type<tc>, window_params = [{pipeline_mode = #tpu.pipeline_mode<synchronous>, transform_indices = @transform_0, window_bounds = array<i64: 16, 8>}, {pipeline_mode = #tpu.pipeline_mode<synchronous>, transform_indices = @transform_1, window_bounds = array<i64: 8, 32>}, {pipeline_mode = #tpu.pipeline_mode<synchronous>, transform_indices = @transform_2, window_bounds = array<i64: 3, 32>}, {transform_indices = @transform_3, window_bounds = array<i64: 1, 32, 96>}, {transform_indices = @transform_4, window_bounds = array<i64: 1, 32, 32>}, {transform_indices = @transform_5, window_bounds = array<i64: 1, 32, 32>}, {transform_indices = @transform_6, window_bounds = array<i64: 1, 32, 32>}, {transform_indices = @transform_7, window_bounds = array<i64: 1, 16, 16>}, {transform_indices = @transform_8, window_bounds = array<i64: 1, 12, 32>}, {pipeline_mode = #tpu.pipeline_mode<synchronous>, transform_indices = @transform_9, window_bounds = array<i64: 16, 32>}]} {
    %c0_i32 = arith.constant 0 : i32
    %0 = arith.cmpi eq, %arg0, %c0_i32 : i32
    %1 = arith.extui %0 : i1 to i32
    %c0_i32_0 = arith.constant 0 : i32
    %2 = arith.cmpi ne, %1, %c0_i32_0 : i32
    scf.if %2 {
      %c0_63 = arith.constant 0 : index
      %c0_64 = arith.constant 0 : index
      %201 = vector.load %arg3[%c0_63, %c0_64] : memref<3x32xf32, #tpu.memory_space<vmem>>, vector<3x32xf32>
      %c0_65 = arith.constant 0 : index
      %c0_66 = arith.constant 0 : index
      %202 = vector.load %arg1[%c0_65, %c0_66] : memref<16x8xf32, #tpu.memory_space<vmem>>, vector<16x8xf32>
      %203 = arith.truncf %202 : vector<16x8xf32> to vector<16x8xbf16>
      %c0_67 = arith.constant 0 : index
      %c0_68 = arith.constant 0 : index
      %204 = vector.load %arg2[%c0_67, %c0_68] : memref<8x32xbf16, #tpu.memory_space<vmem>>, vector<8x32xbf16>
      %cst_69 = arith.constant dense<0.000000e+00> : vector<16x32xf32>
      %205 = tpu.matmul %203, %204, %cst_69 {dimension_numbers = #tpu.dot_dimension_numbers<[1], [0], [0], [1], [0, 0, 1, 1], [], []>} : vector<16x8xbf16>, vector<8x32xbf16>, vector<16x32xf32> -> vector<16x32xf32>
      %206 = vector.extract_strided_slice %201 {offsets = [0, 0], sizes = [1, 32], strides = [1, 1]} : vector<3x32xf32> to vector<1x32xf32>
      %207 = vector.broadcast %206 : vector<1x32xf32> to vector<16x32xf32>
      %208 = arith.addf %205, %207 : vector<16x32xf32>
      %209 = vector.extract_strided_slice %201 {offsets = [1, 0], sizes = [1, 32], strides = [1, 1]} : vector<3x32xf32> to vector<1x32xf32>
      %210 = vector.extract_strided_slice %201 {offsets = [2, 0], sizes = [1, 32], strides = [1, 1]} : vector<3x32xf32> to vector<1x32xf32>
      %cst_70 = arith.constant dense<0.000000e+00> : vector<16xf32>
      %211 = vector.multi_reduction <add>, %208, %cst_70 [1] : vector<16x32xf32> to vector<16xf32>
      %212 = vector.shape_cast %211 : vector<16xf32> to vector<16x1xf32>
      %cst_71 = arith.constant 3.200000e+01 : f32
      %213 = vector.broadcast %cst_71 : f32 to vector<16x1xf32>
      %214 = arith.divf %212, %213 : vector<16x1xf32>
      %215 = arith.mulf %208, %208 : vector<16x32xf32>
      %cst_72 = arith.constant dense<0.000000e+00> : vector<16xf32>
      %216 = vector.multi_reduction <add>, %215, %cst_72 [1] : vector<16x32xf32> to vector<16xf32>
      %217 = vector.shape_cast %216 : vector<16xf32> to vector<16x1xf32>
      %cst_73 = arith.constant 3.200000e+01 : f32
      %218 = vector.broadcast %cst_73 : f32 to vector<16x1xf32>
      %219 = arith.divf %217, %218 : vector<16x1xf32>
      %220 = vector.broadcast %214 : vector<16x1xf32> to vector<16x32xf32>
      %221 = arith.subf %208, %220 : vector<16x32xf32>
      %222 = arith.mulf %214, %214 : vector<16x1xf32>
      %223 = arith.subf %219, %222 : vector<16x1xf32>
      %cst_74 = arith.constant 9.99999974E-6 : f32
      %224 = vector.broadcast %cst_74 : f32 to vector<16x1xf32>
      %225 = arith.addf %223, %224 : vector<16x1xf32>
      %226 = math.rsqrt %225 : vector<16x1xf32>
      %227 = vector.broadcast %226 : vector<16x1xf32> to vector<16x32xf32>
      %228 = arith.mulf %221, %227 : vector<16x32xf32>
      %229 = vector.broadcast %209 : vector<1x32xf32> to vector<16x32xf32>
      %230 = arith.mulf %228, %229 : vector<16x32xf32>
      %231 = vector.broadcast %210 : vector<1x32xf32> to vector<16x32xf32>
      %232 = arith.addf %230, %231 : vector<16x32xf32>
      %c0_75 = arith.constant 0 : index
      %c0_76 = arith.constant 0 : index
      %233 = vector.load %arg11[%c0_75, %c0_76] : memref<16x32xf32, #tpu.memory_space<vmem>>, vector<16x32xf32>
      tpu.vector_store %arg11[%c0_75, %c0_76], %232 {strides = array<i32>} : memref<16x32xf32, #tpu.memory_space<vmem>>, vector<16x32xf32>,
    } else {
    }
    %c0 = arith.constant 0 : index
    %c0_1 = arith.constant 0 : index
    %3 = vector.load %arg11[%c0, %c0_1] : memref<16x32xf32, #tpu.memory_space<vmem>>, vector<16x32xf32>
    %c0_2 = arith.constant 0 : index
    %c0_3 = arith.constant 0 : index
    %c0_4 = arith.constant 0 : index
    %4 = vector.load %arg9[%c0_2, %c0_3, %c0_4] : memref<1x12x32xf32, #tpu.memory_space<vmem>>, vector<1x12x32xf32>
    %5 = vector.shape_cast %4 : vector<1x12x32xf32> to vector<12x32xf32>
    %6 = arith.truncf %3 : vector<16x32xf32> to vector<16x32xbf16>
    %c0_5 = arith.constant 0 : index
    %c0_6 = arith.constant 0 : index
    %c0_7 = arith.constant 0 : index
    %7 = vector.load %arg4[%c0_5, %c0_6, %c0_7] : memref<1x32x96xbf16, #tpu.memory_space<vmem>>, vector<1x32x96xbf16>
    %8 = vector.shape_cast %7 : vector<1x32x96xbf16> to vector<32x96xbf16>
    %cst = arith.constant dense<0.000000e+00> : vector<16x96xf32>
    %9 = tpu.matmul %6, %8, %cst {dimension_numbers = #tpu.dot_dimension_numbers<[1], [0], [0], [1], [0, 0, 1, 1], [], []>} : vector<16x32xbf16>, vector<32x96xbf16>, vector<16x96xf32> -> vector<16x96xf32>
    %10 = vector.extract_strided_slice %9 {offsets = [0, 0], sizes = [16, 32], strides = [1, 1]} : vector<16x96xf32> to vector<16x32xf32>
    %11 = vector.extract_strided_slice %5 {offsets = [0, 0], sizes = [1, 32], strides = [1, 1]} : vector<12x32xf32> to vector<1x32xf32>
    %12 = vector.broadcast %11 : vector<1x32xf32> to vector<16x32xf32>
    %13 = arith.addf %10, %12 : vector<16x32xf32>
    %14 = arith.truncf %13 : vector<16x32xf32> to vector<16x32xbf16>
    %15 = vector.extract_strided_slice %9 {offsets = [0, 32], sizes = [16, 32], strides = [1, 1]} : vector<16x96xf32> to vector<16x32xf32>
    %16 = vector.extract_strided_slice %5 {offsets = [1, 0], sizes = [1, 32], strides = [1, 1]} : vector<12x32xf32> to vector<1x32xf32>
    %17 = vector.broadcast %16 : vector<1x32xf32> to vector<16x32xf32>
    %18 = arith.addf %15, %17 : vector<16x32xf32>
    %19 = arith.truncf %18 : vector<16x32xf32> to vector<16x32xbf16>
    %20 = vector.extract_strided_slice %9 {offsets = [0, 64], sizes = [16, 32], strides = [1, 1]} : vector<16x96xf32> to vector<16x32xf32>
    %21 = vector.extract_strided_slice %5 {offsets = [2, 0], sizes = [1, 32], strides = [1, 1]} : vector<12x32xf32> to vector<1x32xf32>
    %22 = vector.broadcast %21 : vector<1x32xf32> to vector<16x32xf32>
    %23 = arith.addf %20, %22 : vector<16x32xf32>
    %24 = arith.truncf %23 : vector<16x32xf32> to vector<16x32xbf16>
    %25 = vector.extract_strided_slice %14 {offsets = [0, 0], sizes = [16, 8], strides = [1, 1]} : vector<16x32xbf16> to vector<16x8xbf16>
    %26 = vector.extract_strided_slice %19 {offsets = [0, 0], sizes = [16, 8], strides = [1, 1]} : vector<16x32xbf16> to vector<16x8xbf16>
    %27 = vector.extract_strided_slice %24 {offsets = [0, 0], sizes = [16, 8], strides = [1, 1]} : vector<16x32xbf16> to vector<16x8xbf16>
    %cst_8 = arith.constant dense<0.000000e+00> : vector<16x16xf32>
    %28 = tpu.matmul %25, %26, %cst_8 {dimension_numbers = #tpu.dot_dimension_numbers<[1], [1], [0], [0], [0, 0, 1, 0], [], []>} : vector<16x8xbf16>, vector<16x8xbf16>, vector<16x16xf32> -> vector<16x16xf32>
    %cst_9 = arith.constant 0.353553385 : f32
    %29 = vector.broadcast %cst_9 : f32 to vector<16x16xf32>
    %30 = arith.mulf %28, %29 : vector<16x16xf32>
    %cst_10 = arith.constant dense<0xFF800000> : vector<16xf32>
    %31 = vector.multi_reduction <maximumf>, %30, %cst_10 [1] : vector<16x16xf32> to vector<16xf32>
    %32 = vector.shape_cast %31 : vector<16xf32> to vector<16x1xf32>
    %33 = vector.broadcast %32 : vector<16x1xf32> to vector<16x16xf32>
    %34 = arith.subf %30, %33 : vector<16x16xf32>
    %35 = math.exp %34 : vector<16x16xf32>
    %cst_11 = arith.constant dense<0.000000e+00> : vector<16xf32>
    %36 = vector.multi_reduction <add>, %35, %cst_11 [1] : vector<16x16xf32> to vector<16xf32>
    %37 = vector.shape_cast %36 : vector<16xf32> to vector<16x1xf32>
    %38 = vector.broadcast %37 : vector<16x1xf32> to vector<16x16xf32>
    %39 = arith.divf %35, %38 : vector<16x16xf32>
    %40 = arith.truncf %39 : vector<16x16xf32> to vector<16x16xbf16>
    %cst_12 = arith.constant dense<0.000000e+00> : vector<16x8xf32>
    %41 = tpu.matmul %40, %27, %cst_12 {dimension_numbers = #tpu.dot_dimension_numbers<[1], [0], [0], [1], [0, 0, 1, 1], [], []>} : vector<16x16xbf16>, vector<16x8xbf16>, vector<16x8xf32> -> vector<16x8xf32>
    %42 = vector.extract_strided_slice %14 {offsets = [0, 8], sizes = [16, 8], strides = [1, 1]} : vector<16x32xbf16> to vector<16x8xbf16>
    %43 = vector.extract_strided_slice %19 {offsets = [0, 8], sizes = [16, 8], strides = [1, 1]} : vector<16x32xbf16> to vector<16x8xbf16>
    %44 = vector.extract_strided_slice %24 {offsets = [0, 8], sizes = [16, 8], strides = [1, 1]} : vector<16x32xbf16> to vector<16x8xbf16>
    %cst_13 = arith.constant dense<0.000000e+00> : vector<16x16xf32>
    %45 = tpu.matmul %42, %43, %cst_13 {dimension_numbers = #tpu.dot_dimension_numbers<[1], [1], [0], [0], [0, 0, 1, 0], [], []>} : vector<16x8xbf16>, vector<16x8xbf16>, vector<16x16xf32> -> vector<16x16xf32>
    %cst_14 = arith.constant 0.353553385 : f32
    %46 = vector.broadcast %cst_14 : f32 to vector<16x16xf32>
    %47 = arith.mulf %45, %46 : vector<16x16xf32>
    %cst_15 = arith.constant dense<0xFF800000> : vector<16xf32>
    %48 = vector.multi_reduction <maximumf>, %47, %cst_15 [1] : vector<16x16xf32> to vector<16xf32>
    %49 = vector.shape_cast %48 : vector<16xf32> to vector<16x1xf32>
    %50 = vector.broadcast %49 : vector<16x1xf32> to vector<16x16xf32>
    %51 = arith.subf %47, %50 : vector<16x16xf32>
    %52 = math.exp %51 : vector<16x16xf32>
    %cst_16 = arith.constant dense<0.000000e+00> : vector<16xf32>
    %53 = vector.multi_reduction <add>, %52, %cst_16 [1] : vector<16x16xf32> to vector<16xf32>
    %54 = vector.shape_cast %53 : vector<16xf32> to vector<16x1xf32>
    %55 = vector.broadcast %54 : vector<16x1xf32> to vector<16x16xf32>
    %56 = arith.divf %52, %55 : vector<16x16xf32>
    %57 = arith.truncf %56 : vector<16x16xf32> to vector<16x16xbf16>
    %cst_17 = arith.constant dense<0.000000e+00> : vector<16x8xf32>
    %58 = tpu.matmul %57, %44, %cst_17 {dimension_numbers = #tpu.dot_dimension_numbers<[1], [0], [0], [1], [0, 0, 1, 1], [], []>} : vector<16x16xbf16>, vector<16x8xbf16>, vector<16x8xf32> -> vector<16x8xf32>
    %59 = vector.extract_strided_slice %14 {offsets = [0, 16], sizes = [16, 8], strides = [1, 1]} : vector<16x32xbf16> to vector<16x8xbf16>
    %60 = vector.extract_strided_slice %19 {offsets = [0, 16], sizes = [16, 8], strides = [1, 1]} : vector<16x32xbf16> to vector<16x8xbf16>
    %61 = vector.extract_strided_slice %24 {offsets = [0, 16], sizes = [16, 8], strides = [1, 1]} : vector<16x32xbf16> to vector<16x8xbf16>
    %cst_18 = arith.constant dense<0.000000e+00> : vector<16x16xf32>
    %62 = tpu.matmul %59, %60, %cst_18 {dimension_numbers = #tpu.dot_dimension_numbers<[1], [1], [0], [0], [0, 0, 1, 0], [], []>} : vector<16x8xbf16>, vector<16x8xbf16>, vector<16x16xf32> -> vector<16x16xf32>
    %cst_19 = arith.constant 0.353553385 : f32
    %63 = vector.broadcast %cst_19 : f32 to vector<16x16xf32>
    %64 = arith.mulf %62, %63 : vector<16x16xf32>
    %cst_20 = arith.constant dense<0xFF800000> : vector<16xf32>
    %65 = vector.multi_reduction <maximumf>, %64, %cst_20 [1] : vector<16x16xf32> to vector<16xf32>
    %66 = vector.shape_cast %65 : vector<16xf32> to vector<16x1xf32>
    %67 = vector.broadcast %66 : vector<16x1xf32> to vector<16x16xf32>
    %68 = arith.subf %64, %67 : vector<16x16xf32>
    %69 = math.exp %68 : vector<16x16xf32>
    %cst_21 = arith.constant dense<0.000000e+00> : vector<16xf32>
    %70 = vector.multi_reduction <add>, %69, %cst_21 [1] : vector<16x16xf32> to vector<16xf32>
    %71 = vector.shape_cast %70 : vector<16xf32> to vector<16x1xf32>
    %72 = vector.broadcast %71 : vector<16x1xf32> to vector<16x16xf32>
    %73 = arith.divf %69, %72 : vector<16x16xf32>
    %74 = arith.truncf %73 : vector<16x16xf32> to vector<16x16xbf16>
    %cst_22 = arith.constant dense<0.000000e+00> : vector<16x8xf32>
    %75 = tpu.matmul %74, %61, %cst_22 {dimension_numbers = #tpu.dot_dimension_numbers<[1], [0], [0], [1], [0, 0, 1, 1], [], []>} : vector<16x16xbf16>, vector<16x8xbf16>, vector<16x8xf32> -> vector<16x8xf32>
    %76 = vector.extract_strided_slice %14 {offsets = [0, 24], sizes = [16, 8], strides = [1, 1]} : vector<16x32xbf16> to vector<16x8xbf16>
    %77 = vector.extract_strided_slice %19 {offsets = [0, 24], sizes = [16, 8], strides = [1, 1]} : vector<16x32xbf16> to vector<16x8xbf16>
    %78 = vector.extract_strided_slice %24 {offsets = [0, 24], sizes = [16, 8], strides = [1, 1]} : vector<16x32xbf16> to vector<16x8xbf16>
    %cst_23 = arith.constant dense<0.000000e+00> : vector<16x16xf32>
    %79 = tpu.matmul %76, %77, %cst_23 {dimension_numbers = #tpu.dot_dimension_numbers<[1], [1], [0], [0], [0, 0, 1, 0], [], []>} : vector<16x8xbf16>, vector<16x8xbf16>, vector<16x16xf32> -> vector<16x16xf32>
    %cst_24 = arith.constant 0.353553385 : f32
    %80 = vector.broadcast %cst_24 : f32 to vector<16x16xf32>
    %81 = arith.mulf %79, %80 : vector<16x16xf32>
    %cst_25 = arith.constant dense<0xFF800000> : vector<16xf32>
    %82 = vector.multi_reduction <maximumf>, %81, %cst_25 [1] : vector<16x16xf32> to vector<16xf32>
    %83 = vector.shape_cast %82 : vector<16xf32> to vector<16x1xf32>
    %84 = vector.broadcast %83 : vector<16x1xf32> to vector<16x16xf32>
    %85 = arith.subf %81, %84 : vector<16x16xf32>
    %86 = math.exp %85 : vector<16x16xf32>
    %cst_26 = arith.constant dense<0.000000e+00> : vector<16xf32>
    %87 = vector.multi_reduction <add>, %86, %cst_26 [1] : vector<16x16xf32> to vector<16xf32>
    %88 = vector.shape_cast %87 : vector<16xf32> to vector<16x1xf32>
    %89 = vector.broadcast %88 : vector<16x1xf32> to vector<16x16xf32>
    %90 = arith.divf %86, %89 : vector<16x16xf32>
    %91 = arith.truncf %90 : vector<16x16xf32> to vector<16x16xbf16>
    %cst_27 = arith.constant dense<0.000000e+00> : vector<16x8xf32>
    %92 = tpu.matmul %91, %78, %cst_27 {dimension_numbers = #tpu.dot_dimension_numbers<[1], [0], [0], [1], [0, 0, 1, 1], [], []>} : vector<16x16xbf16>, vector<16x8xbf16>, vector<16x8xf32> -> vector<16x8xf32>
    %93 = tpu.concatenate %41, %58, %75, %92 in 1 : vector<16x8xf32>, vector<16x8xf32>, vector<16x8xf32>, vector<16x8xf32> -> vector<16x32xf32>
    %94 = arith.truncf %93 : vector<16x32xf32> to vector<16x32xbf16>
    %c0_28 = arith.constant 0 : index
    %c0_29 = arith.constant 0 : index
    %c0_30 = arith.constant 0 : index
    %95 = vector.load %arg5[%c0_28, %c0_29, %c0_30] : memref<1x32x32xbf16, #tpu.memory_space<vmem>>, vector<1x32x32xbf16>
    %96 = vector.shape_cast %95 : vector<1x32x32xbf16> to vector<32x32xbf16>
    %cst_31 = arith.constant dense<0.000000e+00> : vector<16x32xf32>
    %97 = tpu.matmul %94, %96, %cst_31 {dimension_numbers = #tpu.dot_dimension_numbers<[1], [0], [0], [1], [0, 0, 1, 1], [], []>} : vector<16x32xbf16>, vector<32x32xbf16>, vector<16x32xf32> -> vector<16x32xf32>
    %98 = vector.extract_strided_slice %5 {offsets = [3, 0], sizes = [1, 32], strides = [1, 1]} : vector<12x32xf32> to vector<1x32xf32>
    %99 = vector.broadcast %98 : vector<1x32xf32> to vector<16x32xf32>
    %100 = arith.addf %97, %99 : vector<16x32xf32>
    %101 = arith.addf %3, %100 : vector<16x32xf32>
    %102 = vector.extract_strided_slice %5 {offsets = [6, 0], sizes = [1, 32], strides = [1, 1]} : vector<12x32xf32> to vector<1x32xf32>
    %103 = vector.extract_strided_slice %5 {offsets = [7, 0], sizes = [1, 32], strides = [1, 1]} : vector<12x32xf32> to vector<1x32xf32>
    %cst_32 = arith.constant dense<0.000000e+00> : vector<16xf32>
    %104 = vector.multi_reduction <add>, %101, %cst_32 [1] : vector<16x32xf32> to vector<16xf32>
    %105 = vector.shape_cast %104 : vector<16xf32> to vector<16x1xf32>
    %cst_33 = arith.constant 3.200000e+01 : f32
    %106 = vector.broadcast %cst_33 : f32 to vector<16x1xf32>
    %107 = arith.divf %105, %106 : vector<16x1xf32>
    %108 = arith.mulf %101, %101 : vector<16x32xf32>
    %cst_34 = arith.constant dense<0.000000e+00> : vector<16xf32>
    %109 = vector.multi_reduction <add>, %108, %cst_34 [1] : vector<16x32xf32> to vector<16xf32>
    %110 = vector.shape_cast %109 : vector<16xf32> to vector<16x1xf32>
    %cst_35 = arith.constant 3.200000e+01 : f32
    %111 = vector.broadcast %cst_35 : f32 to vector<16x1xf32>
    %112 = arith.divf %110, %111 : vector<16x1xf32>
    %113 = vector.broadcast %107 : vector<16x1xf32> to vector<16x32xf32>
    %114 = arith.subf %101, %113 : vector<16x32xf32>
    %115 = arith.mulf %107, %107 : vector<16x1xf32>
    %116 = arith.subf %112, %115 : vector<16x1xf32>
    %cst_36 = arith.constant 9.99999974E-6 : f32
    %117 = vector.broadcast %cst_36 : f32 to vector<16x1xf32>
    %118 = arith.addf %116, %117 : vector<16x1xf32>
    %119 = math.rsqrt %118 : vector<16x1xf32>
    %120 = vector.broadcast %119 : vector<16x1xf32> to vector<16x32xf32>
    %121 = arith.mulf %114, %120 : vector<16x32xf32>
    %122 = vector.broadcast %102 : vector<1x32xf32> to vector<16x32xf32>
    %123 = arith.mulf %121, %122 : vector<16x32xf32>
    %124 = vector.broadcast %103 : vector<1x32xf32> to vector<16x32xf32>
    %125 = arith.addf %123, %124 : vector<16x32xf32>
    %126 = arith.truncf %125 : vector<16x32xf32> to vector<16x32xbf16>
    %c0_37 = arith.constant 0 : index
    %c0_38 = arith.constant 0 : index
    %c0_39 = arith.constant 0 : index
    %127 = vector.load %arg6[%c0_37, %c0_38, %c0_39] : memref<1x32x32xbf16, #tpu.memory_space<vmem>>, vector<1x32x32xbf16>
    %128 = vector.shape_cast %127 : vector<1x32x32xbf16> to vector<32x32xbf16>
    %cst_40 = arith.constant dense<0.000000e+00> : vector<16x32xf32>
    %129 = tpu.matmul %126, %128, %cst_40 {dimension_numbers = #tpu.dot_dimension_numbers<[1], [0], [0], [1], [0, 0, 1, 1], [], []>} : vector<16x32xbf16>, vector<32x32xbf16>, vector<16x32xf32> -> vector<16x32xf32>
    %130 = vector.extract_strided_slice %5 {offsets = [4, 0], sizes = [1, 32], strides = [1, 1]} : vector<12x32xf32> to vector<1x32xf32>
    %131 = vector.broadcast %130 : vector<1x32xf32> to vector<16x32xf32>
    %132 = arith.addf %129, %131 : vector<16x32xf32>
    %cst_41 = arith.constant 0.000000e+00 : f32
    %133 = vector.broadcast %cst_41 : f32 to vector<16x32xf32>
    %134 = arith.maximumf %132, %133 : vector<16x32xf32>
    %135 = arith.truncf %134 : vector<16x32xf32> to vector<16x32xbf16>
    %c0_42 = arith.constant 0 : index
    %c0_43 = arith.constant 0 : index
    %c0_44 = arith.constant 0 : index
    %136 = vector.load %arg7[%c0_42, %c0_43, %c0_44] : memref<1x32x32xbf16, #tpu.memory_space<vmem>>, vector<1x32x32xbf16>
    %137 = vector.shape_cast %136 : vector<1x32x32xbf16> to vector<32x32xbf16>
    %cst_45 = arith.constant dense<0.000000e+00> : vector<16x32xf32>
    %138 = tpu.matmul %135, %137, %cst_45 {dimension_numbers = #tpu.dot_dimension_numbers<[1], [0], [0], [1], [0, 0, 1, 1], [], []>} : vector<16x32xbf16>, vector<32x32xbf16>, vector<16x32xf32> -> vector<16x32xf32>
    %139 = vector.extract_strided_slice %5 {offsets = [5, 0], sizes = [1, 32], strides = [1, 1]} : vector<12x32xf32> to vector<1x32xf32>
    %140 = vector.broadcast %139 : vector<1x32xf32> to vector<16x32xf32>
    %141 = arith.addf %138, %140 : vector<16x32xf32>
    %142 = arith.addf %125, %141 : vector<16x32xf32>
    %143 = vector.extract_strided_slice %5 {offsets = [8, 0], sizes = [1, 32], strides = [1, 1]} : vector<12x32xf32> to vector<1x32xf32>
    %144 = vector.extract_strided_slice %5 {offsets = [9, 0], sizes = [1, 32], strides = [1, 1]} : vector<12x32xf32> to vector<1x32xf32>
    %cst_46 = arith.constant dense<0.000000e+00> : vector<16xf32>
    %145 = vector.multi_reduction <add>, %142, %cst_46 [1] : vector<16x32xf32> to vector<16xf32>
    %146 = vector.shape_cast %145 : vector<16xf32> to vector<16x1xf32>
    %cst_47 = arith.constant 3.200000e+01 : f32
    %147 = vector.broadcast %cst_47 : f32 to vector<16x1xf32>
    %148 = arith.divf %146, %147 : vector<16x1xf32>
    %149 = arith.mulf %142, %142 : vector<16x32xf32>
    %cst_48 = arith.constant dense<0.000000e+00> : vector<16xf32>
    %150 = vector.multi_reduction <add>, %149, %cst_48 [1] : vector<16x32xf32> to vector<16xf32>
    %151 = vector.shape_cast %150 : vector<16xf32> to vector<16x1xf32>
    %cst_49 = arith.constant 3.200000e+01 : f32
    %152 = vector.broadcast %cst_49 : f32 to vector<16x1xf32>
    %153 = arith.divf %151, %152 : vector<16x1xf32>
    %154 = vector.broadcast %148 : vector<16x1xf32> to vector<16x32xf32>
    %155 = arith.subf %142, %154 : vector<16x32xf32>
    %156 = arith.mulf %148, %148 : vector<16x1xf32>
    %157 = arith.subf %153, %156 : vector<16x1xf32>
    %cst_50 = arith.constant 9.99999974E-6 : f32
    %158 = vector.broadcast %cst_50 : f32 to vector<16x1xf32>
    %159 = arith.addf %157, %158 : vector<16x1xf32>
    %160 = math.rsqrt %159 : vector<16x1xf32>
    %161 = vector.broadcast %160 : vector<16x1xf32> to vector<16x32xf32>
    %162 = arith.mulf %155, %161 : vector<16x32xf32>
    %163 = vector.broadcast %143 : vector<1x32xf32> to vector<16x32xf32>
    %164 = arith.mulf %162, %163 : vector<16x32xf32>
    %165 = vector.broadcast %144 : vector<1x32xf32> to vector<16x32xf32>
    %166 = arith.addf %164, %165 : vector<16x32xf32>
    %c0_51 = arith.constant 0 : index
    %c0_52 = arith.constant 0 : index
    %c0_53 = arith.constant 0 : index
    %167 = vector.load %arg8[%c0_51, %c0_52, %c0_53] : memref<1x16x16xbf16, #tpu.memory_space<vmem>>, vector<1x16x16xbf16>
    %168 = vector.shape_cast %167 : vector<1x16x16xbf16> to vector<16x16xbf16>
    %169 = arith.truncf %166 : vector<16x32xf32> to vector<16x32xbf16>
    %cst_54 = arith.constant dense<0.000000e+00> : vector<16x32xf32>
    %170 = tpu.matmul %168, %169, %cst_54 {dimension_numbers = #tpu.dot_dimension_numbers<[1], [0], [0], [1], [0, 0, 1, 1], [], []>} : vector<16x16xbf16>, vector<16x32xbf16>, vector<16x32xf32> -> vector<16x32xf32>
    %171 = arith.addf %166, %170 : vector<16x32xf32>
    %172 = vector.extract_strided_slice %5 {offsets = [10, 0], sizes = [1, 32], strides = [1, 1]} : vector<12x32xf32> to vector<1x32xf32>
    %173 = vector.extract_strided_slice %5 {offsets = [11, 0], sizes = [1, 32], strides = [1, 1]} : vector<12x32xf32> to vector<1x32xf32>
    %cst_55 = arith.constant dense<0.000000e+00> : vector<16xf32>
    %174 = vector.multi_reduction <add>, %171, %cst_55 [1] : vector<16x32xf32> to vector<16xf32>
    %175 = vector.shape_cast %174 : vector<16xf32> to vector<16x1xf32>
    %cst_56 = arith.constant 3.200000e+01 : f32
    %176 = vector.broadcast %cst_56 : f32 to vector<16x1xf32>
    %177 = arith.divf %175, %176 : vector<16x1xf32>
    %178 = arith.mulf %171, %171 : vector<16x32xf32>
    %cst_57 = arith.constant dense<0.000000e+00> : vector<16xf32>
    %179 = vector.multi_reduction <add>, %178, %cst_57 [1] : vector<16x32xf32> to vector<16xf32>
    %180 = vector.shape_cast %179 : vector<16xf32> to vector<16x1xf32>
    %cst_58 = arith.constant 3.200000e+01 : f32
    %181 = vector.broadcast %cst_58 : f32 to vector<16x1xf32>
    %182 = arith.divf %180, %181 : vector<16x1xf32>
    %183 = vector.broadcast %177 : vector<16x1xf32> to vector<16x32xf32>
    %184 = arith.subf %171, %183 : vector<16x32xf32>
    %185 = arith.mulf %177, %177 : vector<16x1xf32>
    %186 = arith.subf %182, %185 : vector<16x1xf32>
    %cst_59 = arith.constant 9.99999974E-6 : f32
    %187 = vector.broadcast %cst_59 : f32 to vector<16x1xf32>
    %188 = arith.addf %186, %187 : vector<16x1xf32>
    %189 = math.rsqrt %188 : vector<16x1xf32>
    %190 = vector.broadcast %189 : vector<16x1xf32> to vector<16x32xf32>
    %191 = arith.mulf %184, %190 : vector<16x32xf32>
    %192 = vector.broadcast %172 : vector<1x32xf32> to vector<16x32xf32>
    %193 = arith.mulf %191, %192 : vector<16x32xf32>
    %194 = vector.broadcast %173 : vector<1x32xf32> to vector<16x32xf32>
    %195 = arith.addf %193, %194 : vector<16x32xf32>
    %196 = arith.addf %195, %3 : vector<16x32xf32>
    %c0_60 = arith.constant 0 : index
    %c0_61 = arith.constant 0 : index
    %197 = vector.load %arg11[%c0_60, %c0_61] : memref<16x32xf32, #tpu.memory_space<vmem>>, vector<16x32xf32>
    tpu.vector_store %arg11[%c0_60, %c0_61], %196 {strides = array<i32>} : memref<16x32xf32, #tpu.memory_space<vmem>>, vector<16x32xf32>,
    %c1_i32 = arith.constant 1 : i32
    %198 = arith.cmpi eq, %arg0, %c1_i32 : i32
    %199 = arith.extui %198 : i1 to i32
    %c0_i32_62 = arith.constant 0 : i32
    %200 = arith.cmpi ne, %199, %c0_i32_62 : i32
    scf.if %200 {
      %c0_63 = arith.constant 0 : index
      %c0_64 = arith.constant 0 : index
      %201 = vector.load %arg10[%c0_63, %c0_64] : memref<16x32xf32, #tpu.memory_space<vmem>>, vector<16x32xf32>
      tpu.vector_store %arg10[%c0_63, %c0_64], %196 {strides = array<i32>} : memref<16x32xf32, #tpu.memory_space<vmem>>, vector<16x32xf32>,
    } else {
    }
    return
  }
  func.func @transform_0(%arg0: i32) -> (i32, i32) {
    %c0_i32 = arith.constant 0 : i32
    %c0_i32_0 = arith.constant 0 : i32
    %c0_i32_1 = arith.constant 0 : i32
    return %c0_i32, %c0_i32_0 : i32, i32
  }
  func.func @transform_1(%arg0: i32) -> (i32, i32) {
    %c0_i32 = arith.constant 0 : i32
    %c0_i32_0 = arith.constant 0 : i32
    %c0_i32_1 = arith.constant 0 : i32
    return %c0_i32, %c0_i32_0 : i32, i32
  }
  func.func @transform_2(%arg0: i32) -> (i32, i32) {
    %c0_i32 = arith.constant 0 : i32
    %c0_i32_0 = arith.constant 0 : i32
    %c0_i32_1 = arith.constant 0 : i32
    return %c0_i32, %c0_i32_0 : i32, i32
  }
  func.func @transform_3(%arg0: i32) -> (i32, i32, i32) {
    %c0_i32 = arith.constant 0 : i32
    %c0_i32_0 = arith.constant 0 : i32
    %c0_i32_1 = arith.constant 0 : i32
    return %arg0, %c0_i32, %c0_i32_0 : i32, i32, i32
  }
  func.func @transform_4(%arg0: i32) -> (i32, i32, i32) {
    %c0_i32 = arith.constant 0 : i32
    %c0_i32_0 = arith.constant 0 : i32
    %c0_i32_1 = arith.constant 0 : i32
    return %arg0, %c0_i32, %c0_i32_0 : i32, i32, i32
  }
  func.func @transform_5(%arg0: i32) -> (i32, i32, i32) {
    %c0_i32 = arith.constant 0 : i32
    %c0_i32_0 = arith.constant 0 : i32
    %c0_i32_1 = arith.constant 0 : i32
    return %arg0, %c0_i32, %c0_i32_0 : i32, i32, i32
  }
  func.func @transform_6(%arg0: i32) -> (i32, i32, i32) {
    %c0_i32 = arith.constant 0 : i32
    %c0_i32_0 = arith.constant 0 : i32
    %c0_i32_1 = arith.constant 0 : i32
    return %arg0, %c0_i32, %c0_i32_0 : i32, i32, i32
  }
  func.func @transform_7(%arg0: i32) -> (i32, i32, i32) {
    %c0_i32 = arith.constant 0 : i32
    %c0_i32_0 = arith.constant 0 : i32
    %c0_i32_1 = arith.constant 0 : i32
    return %arg0, %c0_i32, %c0_i32_0 : i32, i32, i32
  }
  func.func @transform_8(%arg0: i32) -> (i32, i32, i32) {
    %c0_i32 = arith.constant 0 : i32
    %c0_i32_0 = arith.constant 0 : i32
    %c0_i32_1 = arith.constant 0 : i32
    return %arg0, %c0_i32, %c0_i32_0 : i32, i32, i32
  }
  func.func @transform_9(%arg0: i32) -> (i32, i32) {
    %c0_i32 = arith.constant 0 : i32
    %c0_i32_0 = arith.constant 0 : i32
    %c0_i32_1 = arith.constant 0 : i32
    return %c0_i32, %c0_i32_0 : i32, i32
  }
}

</mosaic_0001>

<llo_original>
// kernel: forward.1
$region0: #{forward.1}
  #allocation0 [shape = 'u32[]', space=smem, size = 0x4, offset = 0x4, fixed_abs, tag = 'smem constant byte address 0x4 - core index']
  #allocation1 [shape = 'u32[144,128]{1,0:T(1,128)}', space=vmem, size = 0x12000, scoped, tag = 'internal scratch']
  #allocation2 [shape = 'f32[16,32]{1,0:T(8,128)}', space=vmem, size = 0x2000, scoped, tag = 'scratch operand']
  %s0 = inlined_call_operand.vmem [shape: f32[16,8], index: 0, kind: input, shape index: {}]
  %s1 = inlined_call_operand.vmem [shape: bf16[8,32], index: 1, kind: input, shape index: {}]
  %s2 = inlined_call_operand.hbm [shape: f32[3,32], index: 2, kind: input, shape index: {}]
  %s3 = inlined_call_operand.vmem [shape: bf16[2,32,96], index: 3, kind: input, shape index: {}]
  %s4 = inlined_call_operand.vmem [shape: bf16[2,32,32], index: 4, kind: input, shape index: {}]
  %s5 = inlined_call_operand.hbm [shape: bf16[2,32,32], index: 5, kind: input, shape index: {}]
  %s6 = inlined_call_operand.hbm [shape: bf16[2,32,32], index: 6, kind: input, shape index: {}]
  %s7 = inlined_call_operand.hbm [shape: bf16[2,16,16], index: 7, kind: input, shape index: {}]
  %s8 = inlined_call_operand.vmem [shape: f32[2,12,32], index: 8, kind: input, shape index: {}]
  %s9 = inlined_call_operand.hbm [shape: f32[16,32], index: 9, kind: output, shape index: {}]
  %s10 = sld [smem:[#allocation0]]
  $region93: #{forward.1} parent=0
    _
  %s12 = ssub.s32 1, %s10
  %s13 = scalar_select 0, %s12, %s10
  $region1: #{forward.1} parent=0
    #allocation3 [shape = 'u8[2048]{0}', space=vmem, size = 0x800, scoped, tag = 'input window, operand 2, single buffered']
    #allocation4 [shape = 's32[2]{0}', space=sflag, size = 0x8, scoped, tag = 'scoped memory for forward.1']
    #allocation5 [shape = 's32[2]{0}', space=sflag, size = 0x8, scoped, tag = 'scoped memory for forward.1']
    #allocation6 [shape = 'u8[16384]{0}', space=vmem, size = 0x4000, scoped, tag = 'input window, operand 5']
    #allocation7 [shape = 's32[2]{0}', space=sflag, size = 0x8, scoped, tag = 'scoped memory for forward.1']
    #allocation8 [shape = 'u8[16384]{0}', space=vmem, size = 0x4000, scoped, tag = 'input window, operand 6']
    #allocation9 [shape = 'u8[8192]{0}', space=vmem, size = 0x2000, scoped, tag = 'input window, operand 7']
    #allocation10 [shape = 's32[2]{0}', space=sflag, size = 0x8, scoped, tag = 'scoped memory for forward.1']
    #allocation11 [shape = 'u8[8192]{0}', space=vmem, size = 0x2000, scoped, tag = 'output window, operand 0, single buffered']
    %14 = vsyncpa [#allocation4], 0
    %15 = vsyncpa [#allocation7], 0
    %s16 = scalar_lea.sflag [#allocation7], 1
    %17 = vsyncpa %s16, 0
    %18 = vsyncpa [#allocation10], 0
    %s19 = scalar_lea.sflag [#allocation10], 1
    %20 = vsyncpa %s19, 0
    %21 = vsyncpa [#allocation5], 0
    loop: start=0, step=1, limit=4
    $region2: #{forward.1} parent=1 // loop_pre_header
      _
    $region3: #{forward.1} parent=1 // loop_header
      %s23 = sphi 0, %s27
      %p24 = scmp.ge.s32.totalorder %s23, 4
      %s31 = sphi 0, %s31
      %s33 = sphi 0, %s31
      %s34 = sphi 0, %s33
      %s48 = sphi 0, %s34
      %s52 = sphi 0, %s52
      %s54 = sphi 0, %s52
      %s55 = sphi 0, %s54
      %s69 = sphi 0, %s55
      %s73 = sphi 0, %s73
      %s75 = sphi 0, %s73
      %s76 = sphi 0, %s75
      %s90 = sphi 0, %s76
      %s96 = sphi 0, %s98
      %s99 = sphi 0, %s96
      %s100 = sphi 0, %s99
      %s116 = sphi 0, %s100
      %s122 = sphi 0, %s124
      %s125 = sphi 0, %s122
      %s126 = sphi 0, %s125
      %s142 = sphi 0, %s126
      %s148 = sphi 0, %s150
      %s151 = sphi 0, %s148
      %s152 = sphi 0, %s151
      %s168 = sphi 0, %s152
      %s174 = sphi 0, %s176
      %s177 = sphi 0, %s174
      %s178 = sphi 0, %s177
      %s194 = sphi 0, %s178
      %s200 = sphi 0, %s202
      %s203 = sphi 0, %s200
      %s204 = sphi 0, %s203
      %s220 = sphi 0, %s204
      %s226 = sphi 0, %s228
      %s229 = sphi 0, %s226
      %s230 = sphi 0, %s229
      %s246 = sphi 0, %s230
      %s250 = sphi 0, %s250
      %s252 = sphi 0, %s250
      %s253 = sphi 0, %s252
      %s267 = sphi 0, %s253
    $region4: #{forward.1} parent=1 // loop_header_branch
      %26 = sbr.rel (%p24) target = $region8
    $region5: #{forward.1} parent=1 // loop_body
      %s28 = ssub.s32 %s23, 1
      %s29 = ssub.s32 %s23, 2
      %s30 = sadd.s32 %s23, 1
      %s32 = sadd.s32 %s31, 1
      %p35 = scmp.eq.s32.totalorder %s23, 1
      %p36 = scmp.ne.s32.totalorder %s31, %s33
      %p37 = scmp.eq.s32.totalorder %s23, 0
      %p38 = por %p36, %p37
      %p39 = scmp.ne.s32.totalorder %s31, %s33
      %p40 = scmp.eq.s32.totalorder %s28, 1
      %p41 = por %p39, %p40
      %p42 = scmp.ne.s32.totalorder %s33, %s34
      %p43 = scmp.eq.s32.totalorder %s28, 0
      %p44 = por %p42, %p43
      %p45 = scmp.ne.s32.totalorder %s33, %s34
      %p46 = scmp.eq.s32.totalorder %s29, 1
      %p47 = por %p45, %p46
      %p49 = scmp.ne.s32.totalorder %s34, %s48
      %p50 = scmp.eq.s32.totalorder %s29, 0
      %p51 = por %p49, %p50
      %s53 = sadd.s32 %s52, 1
      %p56 = scmp.eq.s32.totalorder %s23, 1
      %p57 = scmp.ne.s32.totalorder %s52, %s54
      %p58 = scmp.eq.s32.totalorder %s23, 0
      %p59 = por %p57, %p58
      %p60 = scmp.ne.s32.totalorder %s52, %s54
      %p61 = scmp.eq.s32.totalorder %s28, 1
      %p62 = por %p60, %p61
      %p63 = scmp.ne.s32.totalorder %s54, %s55
      %p64 = scmp.eq.s32.totalorder %s28, 0
      %p65 = por %p63, %p64
      %p66 = scmp.ne.s32.totalorder %s54, %s55
      %p67 = scmp.eq.s32.totalorder %s29, 1
      %p68 = por %p66, %p67
      %p70 = scmp.ne.s32.totalorder %s55, %s69
      %p71 = scmp.eq.s32.totalorder %s29, 0
      %p72 = por %p70, %p71
      %s74 = sadd.s32 %s73, 1
      %p77 = scmp.eq.s32.totalorder %s23, 1
      %p78 = scmp.ne.s32.totalorder %s73, %s75
      %p79 = scmp.eq.s32.totalorder %s23, 0
      %p80 = por %p78, %p79
      %p81 = scmp.ne.s32.totalorder %s73, %s75
      %p82 = scmp.eq.s32.totalorder %s28, 1
      %p83 = por %p81, %p82
      %p84 = scmp.ne.s32.totalorder %s75, %s76
      %p85 = scmp.eq.s32.totalorder %s28, 0
      %p86 = por %p84, %p85
      %p87 = scmp.ne.s32.totalorder %s75, %s76
      %p88 = scmp.eq.s32.totalorder %s29, 1
      %p89 = por %p87, %p88
      %p91 = scmp.ne.s32.totalorder %s76, %s90
      %p92 = scmp.eq.s32.totalorder %s29, 0
      %p93 = por %p91, %p92
      %s94 = ssub.s32 %s23, %s30
      %p95 = scmp.eq.s32.totalorder %s94, 0
      %s97 = sadd.s32 %s96, 1
      %s98 = scalar_select %p95, %s96, %s97
      %p101 = pneg %p95
      %p102 = scmp.eq.s32.totalorder %s23, 1
      %p103 = por %p101, %p102
      %p104 = scmp.ne.s32.totalorder %s96, %s99
      %p105 = scmp.eq.s32.totalorder %s23, 0
      %p106 = por %p104, %p105
      %p107 = scmp.ne.s32.totalorder %s96, %s99
      %p108 = scmp.eq.s32.totalorder %s28, 1
      %p109 = por %p107, %p108
      %p110 = scmp.ne.s32.totalorder %s99, %s100
      %p111 = scmp.eq.s32.totalorder %s28, 0
      %p112 = por %p110, %p111
      %p113 = scmp.ne.s32.totalorder %s99, %s100
      %p114 = scmp.eq.s32.totalorder %s29, 1
      %p115 = por %p113, %p114
      %p117 = scmp.ne.s32.totalorder %s100, %s116
      %p118 = scmp.eq.s32.totalorder %s29, 0
      %p119 = por %p117, %p118
      %s120 = ssub.s32 %s23, %s30
      %p121 = scmp.eq.s32.totalorder %s120, 0
      %s123 = sadd.s32 %s122, 1
      %s124 = scalar_select %p121, %s122, %s123
      %p127 = pneg %p121
      %p128 = scmp.eq.s32.totalorder %s23, 1
      %p129 = por %p127, %p128
      %p130 = scmp.ne.s32.totalorder %s122, %s125
      %p131 = scmp.eq.s32.totalorder %s23, 0
      %p132 = por %p130, %p131
      %p133 = scmp.ne.s32.totalorder %s122, %s125
      %p134 = scmp.eq.s32.totalorder %s28, 1
      %p135 = por %p133, %p134
      %p136 = scmp.ne.s32.totalorder %s125, %s126
      %p137 = scmp.eq.s32.totalorder %s28, 0
      %p138 = por %p136, %p137
      %p139 = scmp.ne.s32.totalorder %s125, %s126
      %p140 = scmp.eq.s32.totalorder %s29, 1
      %p141 = por %p139, %p140
      %p143 = scmp.ne.s32.totalorder %s126, %s142
      %p144 = scmp.eq.s32.totalorder %s29, 0
      %p145 = por %p143, %p144
      %s146 = ssub.s32 %s23, %s30
      %p147 = scmp.eq.s32.totalorder %s146, 0
      %s149 = sadd.s32 %s148, 1
      %s150 = scalar_select %p147, %s148, %s149
      %p153 = pneg %p147
      %p154 = scmp.eq.s32.totalorder %s23, 1
      %p155 = por %p153, %p154
      %p156 = scmp.ne.s32.totalorder %s148, %s151
      %p157 = scmp.eq.s32.totalorder %s23, 0
      %p158 = por %p156, %p157
      %p159 = scmp.ne.s32.totalorder %s148, %s151
      %p160 = scmp.eq.s32.totalorder %s28, 1
      %p161 = por %p159, %p160
      %p162 = scmp.ne.s32.totalorder %s151, %s152
      %p163 = scmp.eq.s32.totalorder %s28, 0
      %p164 = por %p162, %p163
      %p165 = scmp.ne.s32.totalorder %s151, %s152
      %p166 = scmp.eq.s32.totalorder %s29, 1
      %p167 = por %p165, %p166
      %p169 = scmp.ne.s32.totalorder %s152, %s168
      %p170 = scmp.eq.s32.totalorder %s29, 0
      %p171 = por %p169, %p170
      %s172 = ssub.s32 %s23, %s30
      %p173 = scmp.eq.s32.totalorder %s172, 0
      %s175 = sadd.s32 %s174, 1
      %s176 = scalar_select %p173, %s174, %s175
      %p179 = pneg %p173
      %p180 = scmp.eq.s32.totalorder %s23, 1
      %p181 = por %p179, %p180
      %p182 = scmp.ne.s32.totalorder %s174, %s177
      %p183 = scmp.eq.s32.totalorder %s23, 0
      %p184 = por %p182, %p183
      %p185 = scmp.ne.s32.totalorder %s174, %s177
      %p186 = scmp.eq.s32.totalorder %s28, 1
      %p187 = por %p185, %p186
      %p188 = scmp.ne.s32.totalorder %s177, %s178
      %p189 = scmp.eq.s32.totalorder %s28, 0
      %p190 = por %p188, %p189
      %p191 = scmp.ne.s32.totalorder %s177, %s178
      %p192 = scmp.eq.s32.totalorder %s29, 1
      %p193 = por %p191, %p192
      %p195 = scmp.ne.s32.totalorder %s178, %s194
      %p196 = scmp.eq.s32.totalorder %s29, 0
      %p197 = por %p195, %p196
      %s198 = ssub.s32 %s23, %s30
      %p199 = scmp.eq.s32.totalorder %s198, 0
      %s201 = sadd.s32 %s200, 1
      %s202 = scalar_select %p199, %s200, %s201
      %p205 = pneg %p199
      %p206 = scmp.eq.s32.totalorder %s23, 1
      %p207 = por %p205, %p206
      %p208 = scmp.ne.s32.totalorder %s200, %s203
      %p209 = scmp.eq.s32.totalorder %s23, 0
      %p210 = por %p208, %p209
      %p211 = scmp.ne.s32.totalorder %s200, %s203
      %p212 = scmp.eq.s32.totalorder %s28, 1
      %p213 = por %p211, %p212
      %p214 = scmp.ne.s32.totalorder %s203, %s204
      %p215 = scmp.eq.s32.totalorder %s28, 0
      %p216 = por %p214, %p215
      %p217 = scmp.ne.s32.totalorder %s203, %s204
      %p218 = scmp.eq.s32.totalorder %s29, 1
      %p219 = por %p217, %p218
      %p221 = scmp.ne.s32.totalorder %s204, %s220
      %p222 = scmp.eq.s32.totalorder %s29, 0
      %p223 = por %p221, %p222
      %s224 = ssub.s32 %s23, %s30
      %p225 = scmp.eq.s32.totalorder %s224, 0
      %s227 = sadd.s32 %s226, 1
      %s228 = scalar_select %p225, %s226, %s227
      %p231 = pneg %p225
      %p232 = scmp.eq.s32.totalorder %s23, 1
      %p233 = por %p231, %p232
      %p234 = scmp.ne.s32.totalorder %s226, %s229
      %p235 = scmp.eq.s32.totalorder %s23, 0
      %p236 = por %p234, %p235
      %p237 = scmp.ne.s32.totalorder %s226, %s229
      %p238 = scmp.eq.s32.totalorder %s28, 1
      %p239 = por %p237, %p238
      %p240 = scmp.ne.s32.totalorder %s229, %s230
      %p241 = scmp.eq.s32.totalorder %s28, 0
      %p242 = por %p240, %p241
      %p243 = scmp.ne.s32.totalorder %s229, %s230
      %p244 = scmp.eq.s32.totalorder %s29, 1
      %p245 = por %p243, %p244
      %p247 = scmp.ne.s32.totalorder %s230, %s246
      %p248 = scmp.eq.s32.totalorder %s29, 0
      %p249 = por %p247, %p248
      %s251 = sadd.s32 %s250, 1
      %p254 = scmp.eq.s32.totalorder %s23, 1
      %p255 = scmp.ne.s32.totalorder %s250, %s252
      %p256 = scmp.eq.s32.totalorder %s23, 0
      %p257 = por %p255, %p256
      %p258 = scmp.ne.s32.totalorder %s250, %s252
      %p259 = scmp.eq.s32.totalorder %s28, 1
      %p260 = por %p258, %p259
      %p261 = scmp.ne.s32.totalorder %s252, %s253
      %p262 = scmp.eq.s32.totalorder %s28, 0
      %p263 = por %p261, %p262
      %p264 = scmp.ne.s32.totalorder %s252, %s253
      %p265 = scmp.eq.s32.totalorder %s29, 1
      %p266 = por %p264, %p265
      %p268 = scmp.ne.s32.totalorder %s253, %s267
      %p269 = scmp.eq.s32.totalorder %s29, 0
      %p270 = por %p268, %p269
      %p271 = scmp.le.s32.totalorder 1, %s23
      %p272 = scmp.lt.s32.totalorder %s23, 3
      %p273 = pnand %p271, %p272
      %p274 = pneg %p273
      // Predicated region
      $region9: #{forward.1} parent=5 // pred_check
        _
      $region10: #{forward.1} parent=5 // pred_check_branch
        %276 = sbr.rel (%p273) target = $region12
      $region11: #{forward.1} parent=5 // pred_region
        %s277 = ssub.s32 %s23, 1
        // Predicated region
        $region13: #{forward.1} parent=11 // pred_check
          %p278 = pneg %p44
        $region14: #{forward.1} parent=11 // pred_check_branch
          %280 = sbr.rel (%p278) target = $region16
        $region15: #{forward.1} parent=11 // pred_region
          _
        $region16: #{forward.1} parent=11 // pred_fallthru
          _
        // Predicated region
        $region17: #{forward.1} parent=11 // pred_check
          %p281 = pneg %p65
        $region18: #{forward.1} parent=11 // pred_check_branch
          %283 = sbr.rel (%p281) target = $region20
        $region19: #{forward.1} parent=11 // pred_region
          _
        $region20: #{forward.1} parent=11 // pred_fallthru
          _
        // Predicated region
        $region21: #{forward.1} parent=11 // pred_check
          %p284 = pneg %p86
        $region22: #{forward.1} parent=11 // pred_check_branch
          %286 = sbr.rel (%p284) target = $region24
        $region23: #{forward.1} parent=11 // pred_region
          %s288 = ssub.s32 64, 64
          %289 = vsyncadd [#allocation4], %s288
          %s291 = sshll.u32 [#allocation3], 4
          %s292 = int_to_ptr.vmem [resolvable:$true] %s291
          %294 = dma.hbm_to_vmem [thread:$0]  %s2, 64, %s292, [#allocation4]
        $region24: #{forward.1} parent=11 // pred_fallthru
          _
      $region12: #{forward.1} parent=5 // pred_fallthru
        _
      %p295 = scmp.lt.s32.totalorder %s23, 2
      // Predicated region
      $region25: #{forward.1} parent=5 // pred_check
        %p296 = pneg %p295
      $region26: #{forward.1} parent=5 // pred_check_branch
        %298 = sbr.rel (%p296) target = $region28
      $region27: #{forward.1} parent=5 // pred_region
        // Predicated region
        $region29: #{forward.1} parent=27 // pred_check
          %p299 = pneg %p106
        $region30: #{forward.1} parent=27 // pred_check_branch
          %301 = sbr.rel (%p299) target = $region32
        $region31: #{forward.1} parent=27 // pred_region
          %p302 = scmp.lt.s32.totalorder %s23, 1
          %s303 = scalar_select %p302, %s23, 1
          %s304 = smul.addr %s303, 4
          %s305 = smul.addr %s304, 4
          %s306 = scalar_lea.vmem %s3, %s305
        $region32: #{forward.1} parent=27 // pred_fallthru
          _
        // Predicated region
        $region33: #{forward.1} parent=27 // pred_check
          %p307 = pneg %p132
        $region34: #{forward.1} parent=27 // pred_check_branch
          %309 = sbr.rel (%p307) target = $region36
        $region35: #{forward.1} parent=27 // pred_region
          %p310 = scmp.lt.s32.totalorder %s23, 1
          %s311 = scalar_select %p310, %s23, 1
          %s312 = smul.addr %s311, 4
          %s313 = smul.addr %s312, 4
          %s314 = scalar_lea.vmem %s4, %s313
        $region36: #{forward.1} parent=27 // pred_fallthru
          _
        // Predicated region
        $region37: #{forward.1} parent=27 // pred_check
          %p315 = pneg %p158
        $region38: #{forward.1} parent=27 // pred_check_branch
          %317 = sbr.rel (%p315) target = $region40
        $region39: #{forward.1} parent=27 // pred_region
          %s318 = sand.u32 %s23, 1
          %s319 = scalar_lea.sflag [#allocation7], %s318
          %s320 = sand.u32 %s148, 1
          %s321 = smul.addr %s320, 16
          %s322 = scalar_lea.vmem [#allocation6], %s321
          %s324 = ssub.s32 256, 256
          %325 = vsyncadd %s319, %s324
          %s326 = smul.addr %s23, 4
          %s327 = smul.addr %s326, 64
          %s328 = scalar_lea.hbm %s5, %s327
          %s329 = sshll.u32 %s322, 4
          %s330 = int_to_ptr.vmem [resolvable:$true] %s329
          %335 = dma.hbm_to_vmem [thread:$0]  %s328, 256, %s330, %s319, 64, 64, 4
        $region40: #{forward.1} parent=27 // pred_fallthru
          _
        // Predicated region
        $region41: #{forward.1} parent=27 // pred_check
          %p336 = pneg %p184
        $region42: #{forward.1} parent=27 // pred_check_branch
          %338 = sbr.rel (%p336) target = $region44
        $region43: #{forward.1} parent=27 // pred_region
          %s339 = sand.u32 %s23, 1
          %s340 = scalar_lea.sflag [#allocation7], %s339
          %s341 = sand.u32 %s174, 1
          %s342 = smul.addr %s341, 16
          %s343 = scalar_lea.vmem [#allocation8], %s342
          %s345 = ssub.s32 256, 256
          %346 = vsyncadd %s340, %s345
          %s347 = smul.addr %s23, 4
          %s348 = smul.addr %s347, 64
          %s349 = scalar_lea.hbm %s6, %s348
          %s350 = sshll.u32 %s343, 4
          %s351 = int_to_ptr.vmem [resolvable:$true] %s350
          %356 = dma.hbm_to_vmem [thread:$0]  %s349, 256, %s351, %s340, 64, 64, 4
        $region44: #{forward.1} parent=27 // pred_fallthru
          _
        // Predicated region
        $region45: #{forward.1} parent=27 // pred_check
          %p357 = pneg %p210
        $region46: #{forward.1} parent=27 // pred_check_branch
          %359 = sbr.rel (%p357) target = $region48
        $region47: #{forward.1} parent=27 // pred_region
          %s360 = sand.u32 %s200, 1
          %s361 = scalar_lea.sflag [#allocation10], %s360
          %s362 = sand.u32 %s200, 1
          %s363 = smul.addr %s362, 8
          %s364 = scalar_lea.vmem [#allocation9], %s363
          %s366 = ssub.s32 128, 128
          %367 = vsyncadd %s361, %s366
          %s368 = smul.addr %s23, 2
          %s369 = smul.addr %s368, 64
          %s370 = scalar_lea.hbm %s7, %s369
          %s371 = sshll.u32 %s364, 4
          %s372 = int_to_ptr.vmem [resolvable:$true] %s371
          %377 = dma.hbm_to_vmem [thread:$0]  %s370, 128, %s372, %s361, 64, 64, 4
        $region48: #{forward.1} parent=27 // pred_fallthru
          _
        // Predicated region
        $region49: #{forward.1} parent=27 // pred_check
          %p378 = pneg %p236
        $region50: #{forward.1} parent=27 // pred_check_branch
          %380 = sbr.rel (%p378) target = $region52
        $region51: #{forward.1} parent=27 // pred_region
          %p381 = scmp.lt.s32.totalorder %s23, 1
          %s382 = scalar_select %p381, %s23, 1
          %s383 = smul.addr %s382, 2
          %s384 = smul.addr %s383, 8
          %s385 = scalar_lea.vmem %s8, %s384
        $region52: #{forward.1} parent=27 // pred_fallthru
          _
      $region28: #{forward.1} parent=5 // pred_fallthru
        _
      %p386 = scmp.le.s32.totalorder 1, %s23
      %p387 = scmp.lt.s32.totalorder %s23, 3
      %p388 = pnand %p386, %p387
      %p389 = pneg %p388
      // Predicated region
      $region53: #{forward.1} parent=5 // pred_check
        _
      $region54: #{forward.1} parent=5 // pred_check_branch
        %391 = sbr.rel (%p388) target = $region56
      $region55: #{forward.1} parent=5 // pred_region
        %s392 = ssub.s32 %s23, 1
        // Predicated region
        $region57: #{forward.1} parent=55 // pred_check
          %p393 = pneg %p86
        $region58: #{forward.1} parent=55 // pred_check_branch
          %395 = sbr.rel (%p393) target = $region60
        $region59: #{forward.1} parent=55 // pred_region
          %396 = dma.done [#allocation4], 64
        $region60: #{forward.1} parent=55 // pred_fallthru
          _
        %s397 = sand.u32 %s28, 1
        %s398 = scalar_lea.sflag [#allocation7], %s397
        %s399 = sand.u32 %s151, 1
        %s400 = smul.addr %s399, 16
        %s401 = scalar_lea.vmem [#allocation6], %s400
        // Predicated region
        $region61: #{forward.1} parent=55 // pred_check
          %p402 = pneg %p164
        $region62: #{forward.1} parent=55 // pred_check_branch
          %404 = sbr.rel (%p402) target = $region64
        $region63: #{forward.1} parent=55 // pred_region
          %405 = dma.done %s398, 256
        $region64: #{forward.1} parent=55 // pred_fallthru
          _
        %s406 = sand.u32 %s28, 1
        %s407 = scalar_lea.sflag [#allocation7], %s406
        %s408 = sand.u32 %s177, 1
        %s409 = smul.addr %s408, 16
        %s410 = scalar_lea.vmem [#allocation8], %s409
        // Predicated region
        $region65: #{forward.1} parent=55 // pred_check
          %p411 = pneg %p190
        $region66: #{forward.1} parent=55 // pred_check_branch
          %413 = sbr.rel (%p411) target = $region68
        $region67: #{forward.1} parent=55 // pred_region
          %414 = dma.done %s407, 256
        $region68: #{forward.1} parent=55 // pred_fallthru
          _
        %s415 = sand.u32 %s203, 1
        %s416 = scalar_lea.sflag [#allocation10], %s415
        %s417 = sand.u32 %s203, 1
        %s418 = smul.addr %s417, 8
        %s419 = scalar_lea.vmem [#allocation9], %s418
        // Predicated region
        $region69: #{forward.1} parent=55 // pred_check
          %p420 = pneg %p216
        $region70: #{forward.1} parent=55 // pred_check_branch
          %422 = sbr.rel (%p420) target = $region72
        $region71: #{forward.1} parent=55 // pred_region
          %423 = dma.done %s416, 128
        $region72: #{forward.1} parent=55 // pred_fallthru
          _
        %p424 = pneg %p44
        %p425 = pneg %p41
        %p426 = pneg %p65
        %p427 = pneg %p62
        %p428 = pneg %p86
        %p429 = pneg %p83
        %p430 = scmp.lt.s32.totalorder %s28, 1
        %s431 = scalar_select %p430, %s28, 1
        %s432 = smul.addr %s431, 4
        %s433 = smul.addr %s432, 4
        %s434 = scalar_lea.vmem %s3, %s433
        %p435 = pneg %p112
        %p436 = pneg %p109
        %p437 = scmp.lt.s32.totalorder %s28, 1
        %s438 = scalar_select %p437, %s28, 1
        %s439 = smul.addr %s438, 4
        %s440 = smul.addr %s439, 4
        %s441 = scalar_lea.vmem %s4, %s440
        %p442 = pneg %p138
        %p443 = pneg %p135
        %s444 = sand.u32 %s28, 1
        %s445 = scalar_lea.sflag [#allocation7], %s444
        %s446 = sand.u32 %s151, 1
        %s447 = smul.addr %s446, 16
        %s448 = scalar_lea.vmem [#allocation6], %s447
        %p449 = pneg %p164
        %p450 = pneg %p161
        %s451 = sand.u32 %s28, 1
        %s452 = scalar_lea.sflag [#allocation7], %s451
        %s453 = sand.u32 %s177, 1
        %s454 = smul.addr %s453, 16
        %s455 = scalar_lea.vmem [#allocation8], %s454
        %p456 = pneg %p190
        %p457 = pneg %p187
        %s458 = sand.u32 %s203, 1
        %s459 = scalar_lea.sflag [#allocation10], %s458
        %s460 = sand.u32 %s203, 1
        %s461 = smul.addr %s460, 8
        %s462 = scalar_lea.vmem [#allocation9], %s461
        %p463 = pneg %p216
        %p464 = pneg %p213
        %p465 = scmp.lt.s32.totalorder %s28, 1
        %s466 = scalar_select %p465, %s28, 1
        %s467 = smul.addr %s466, 2
        %s468 = smul.addr %s467, 8
        %s469 = scalar_lea.vmem %s8, %s468
        %p470 = pneg %p242
        %p471 = pneg %p239
        %p472 = pneg %p263
        %p473 = pneg %p260
        %p474 = scmp.lt.s32.totalorder %s28, 1
        %s475 = scalar_select %p474, %s28, 1
        %s476 = smul.addr %s475, 4
        %s477 = smul.addr %s476, 4
        %s478 = scalar_lea.vmem %s3, %s477
        %p479 = scmp.lt.s32.totalorder %s28, 1
        %s480 = scalar_select %p479, %s28, 1
        %s481 = smul.addr %s480, 4
        %s482 = smul.addr %s481, 4
        %s483 = scalar_lea.vmem %s4, %s482
        %p484 = scmp.lt.s32.totalorder %s28, 1
        %s485 = scalar_select %p484, %s28, 1
        %s486 = smul.addr %s485, 2
        %s487 = smul.addr %s486, 8
        %s488 = scalar_lea.vmem %s8, %s487
        %p490 = scmp.eq.s32.totalorder %s28, 0
        // Predicated region
        $region73: #{forward.1} parent=55 // pred_check
          %p491 = pneg %p490
        $region74: #{forward.1} parent=55 // pred_check_branch
          %493 = sbr.rel (%p491) target = $region76
        $region75: #{forward.1} parent=55 // pred_region
          %v494 = vld [vmem:[#allocation3] sm:$0x7]
          %v495 = vld [vmem:[%s0] sm:$0xff]
          %v496 = vld [vmem:[%s0 + $0x8] sm:$0xff]
          %v497 = vpack.c.bf16 %v496, %v495
          %v498 = vld [vmem:[%s1] sm:$0xf]
          %v499 = vlaneseq
          %v500 = vshrl.u32 %v499, 7
          %v501 = vsub.s32 0, %v500
          %v502 = vrot.slane %v494, %v501
          %vm503 = vcmask 64512
          %v505 = vsel %vm503, %v497, 0
          %vm507 = vcmask 1043456
          %v509 = vsel %vm507, %v498, 0
          %511 = vmatprep.subr.bf16.mxu0 0
          %512 = vmatpush1.bf16.msra.mxu0 %v509
          %513 = vmatprep.subr.bf16.mxu0 0
          %514 = vmatpush1.bf16.msra.mxu0 0
          %515 = vmatprep.subr.bf16.mxu0 0
          %516 = vmatpush1.bf16.msra.mxu0 0
          %517 = vmatprep.subr.bf16.mxu0 0
          %518 = vmatpush1.bf16.msra.mxu0 0
          %519 = vmatprep.subr.bf16.mxu0 0
          %520 = vmatpush1.bf16.msra.mxu0 0
          %521 = vmatprep.subr.bf16.mxu0 0
          %522 = vmatpush1.bf16.msra.mxu0 0
          %523 = vmatprep.subr.bf16.mxu0 0
          %524 = vmatpush1.bf16.msra.mxu0 0
          %525 = vmatprep.subr.bf16.mxu0 0
          %526 = vmatpush1.bf16.msra.mxu0 0
          %527 = vmatprep.subr.bf16.mxu0 0
          %528 = vmatpush1.bf16.msra.mxu0 0
          %529 = vmatprep.subr.bf16.mxu0 0
          %530 = vmatpush1.bf16.msra.mxu0 0
          %531 = vmatprep.subr.bf16.mxu0 0
          %532 = vmatpush1.bf16.msra.mxu0 0
          %533 = vmatprep.subr.bf16.mxu0 0
          %534 = vmatpush1.bf16.msra.mxu0 0
          %535 = vmatprep.subr.bf16.mxu0 0
          %536 = vmatpush1.bf16.msra.mxu0 0
          %537 = vmatprep.subr.bf16.mxu0 0
          %538 = vmatpush1.bf16.msra.mxu0 0
          %539 = vmatprep.subr.bf16.mxu0 0
          %540 = vmatpush1.bf16.msra.mxu0 0
          %541 = vmatprep.subr.bf16.mxu0 0
          %542 = vmatpush1.bf16.msra.mxu0 0
          %543 = vmatprep.mubr.bf16.mxu0 0
          %544 = vmatmul.mubr.bf16.gmra.mrb[0].mxu0 %v505
          %v545 = vpop.f32.mrb[0].mxu0
          %v546 = vadd.f32 %v502, %v545
          %v547 = vpop.f32.mrb[0].mxu0
          %v548 = vpop.f32.mrb[0].mxu0
          %v549 = vadd.f32 %v502, %v548
          %v550 = vpop.f32.mrb[0].mxu0
          %551 = vdwg.mxu0
          %vm552 = vcmask 261120
          %v553 = vsel %vm552, %v546, 0.0
          %554 = vadd.xlane.f32.xlu0 %v553
          %v555 = vpop.xlane.xlu0 %554
          %v556 = vsel %vm552, %v549, 0.0
          %557 = vadd.xlane.f32.xlu0 %v556
          %v558 = vpop.xlane.xlu0 %557
          %v559 = vrcp.pop 32.0
          %v560 = vmul.f32 %v555, %v559
          %v561 = vmul.f32 %v558, %v559
          %v562 = vmul.f32 %v546, %v546
          %v563 = vmul.f32 %v549, %v549
          %v564 = vsel %vm552, %v562, 0.0
          %565 = vadd.xlane.f32.xlu0 %v564
          %v566 = vpop.xlane.xlu0 %565
          %v567 = vsel %vm552, %v563, 0.0
          %568 = vadd.xlane.f32.xlu0 %v567
          %v569 = vpop.xlane.xlu0 %568
          %v570 = vmul.f32 %v566, %v559
          %v571 = vmul.f32 %v569, %v559
          %v572 = vsub.f32 %v546, %v560
          %v573 = vsub.f32 %v549, %v561
          %v574 = vmul.f32 %v560, %v560
          %v575 = vmul.f32 %v561, %v561
          %v576 = vsub.f32 %v570, %v574
          %v577 = vsub.f32 %v571, %v575
          %v578 = vadd.f32 %v576, 1e-05
          %v579 = vadd.f32 %v577, 1e-05
          %v580 = vrsqrt.pop %v578
          %v581 = vrsqrt.pop %v579
          %v582 = vmul.f32 %v572, %v580
          %v583 = vmul.f32 %v573, %v581
          %v584 = vlaneseq
          %v585 = vshrl.u32 %v584, 7
          %v586 = vsub.s32 1, %v585
          %v587 = vrot.slane %v494, %v586
          %v588 = vmul.f32 %v582, %v587
          %v589 = vmul.f32 %v583, %v587
          %v590 = vlaneseq
          %v591 = vshrl.u32 %v590, 7
          %v592 = vsub.s32 2, %v591
          %v593 = vrot.slane %v494, %v592
          %v594 = vadd.f32 %v588, %v593
          %v595 = vadd.f32 %v589, %v593
          %596 = vst.msk [vmem:[#allocation2] sm:$0xff] %vm552, %v594
          %597 = vst.msk [vmem:[#allocation2 + $0x8] sm:$0xff] %vm552, %v595
        $region76: #{forward.1} parent=55 // pred_fallthru
          _
        %v598 = vld [vmem:[#allocation2] sm:$0xff]
        %v599 = vld [vmem:[#allocation2 + $0x8] sm:$0xff]
        %v600 = vld [vmem:[%s488] sm:$0xff]
        %v601 = vld [vmem:[%s488 + $0x8] sm:$0xf]
        %v602 = vpack.c.bf16 %v599, %v598
        %v603 = vld [vmem:[%s478] sm:$0xf]
        %v604 = vld [vmem:[%s478 + $0x4] sm:$0xf]
        %v605 = vld [vmem:[%s478 + $0x8] sm:$0xf]
        %v606 = vld [vmem:[%s478 + $0xc] sm:$0xf]
        %v611 = vunpack.c.l.b16 %v603
        %v612 = vunpack.c.l.b16 %v604
        %v613 = vunpack.c.l.b16 %v605
        %v614 = vunpack.c.l.b16 %v606
        %v615 = vpack.c.b16 %v612, %v611
        %v616 = vpack.c.b16 %v614, %v613
        %vm619 = vcmask 261120
        %v621 = vsel %vm619, %v602, 0
        %623 = vmatprep.subr.bf16.mxu0 0
        %624 = vmatpush1.bf16.msra.mxu0 %v615
        %625 = vmatprep.subr.bf16.mxu0 0
        %626 = vmatpush1.bf16.msra.mxu0 %v616
        %627 = vmatprep.subr.bf16.mxu0 0
        %628 = vmatpush1.bf16.msra.mxu0 0
        %629 = vmatprep.subr.bf16.mxu0 0
        %630 = vmatpush1.bf16.msra.mxu0 0
        %631 = vmatprep.subr.bf16.mxu0 0
        %632 = vmatpush1.bf16.msra.mxu0 0
        %633 = vmatprep.subr.bf16.mxu0 0
        %634 = vmatpush1.bf16.msra.mxu0 0
        %635 = vmatprep.subr.bf16.mxu0 0
        %636 = vmatpush1.bf16.msra.mxu0 0
        %637 = vmatprep.subr.bf16.mxu0 0
        %638 = vmatpush1.bf16.msra.mxu0 0
        %639 = vmatprep.subr.bf16.mxu0 0
        %640 = vmatpush1.bf16.msra.mxu0 0
        %641 = vmatprep.subr.bf16.mxu0 0
        %642 = vmatpush1.bf16.msra.mxu0 0
        %643 = vmatprep.subr.bf16.mxu0 0
        %644 = vmatpush1.bf16.msra.mxu0 0
        %645 = vmatprep.subr.bf16.mxu0 0
        %646 = vmatpush1.bf16.msra.mxu0 0
        %647 = vmatprep.subr.bf16.mxu0 0
        %648 = vmatpush1.bf16.msra.mxu0 0
        %649 = vmatprep.subr.bf16.mxu0 0
        %650 = vmatpush1.bf16.msra.mxu0 0
        %651 = vmatprep.subr.bf16.mxu0 0
        %652 = vmatpush1.bf16.msra.mxu0 0
        %653 = vmatprep.subr.bf16.mxu0 0
        %654 = vmatpush1.bf16.msra.mxu0 0
        %655 = vmatprep.mubr.bf16.mxu0 0
        %656 = vmatmul.mubr.bf16.gmra.mrb[0].mxu0 %v621
        %v657 = vpop.f32.mrb[0].mxu0
        %v658 = vadd.f32 0.0, %v657
        %v659 = vpop.f32.mrb[0].mxu0
        %v660 = vpop.f32.mrb[0].mxu0
        %v661 = vadd.f32 0.0, %v660
        %v662 = vpop.f32.mrb[0].mxu0
        %663 = vdwg.mxu0
        %v664 = vlaneseq
        %v665 = vshrl.u32 %v664, 7
        %v666 = vsub.s32 0, %v665
        %v667 = vrot.slane %v600, %v666
        %v668 = vadd.f32 %v658, %v667
        %v669 = vadd.f32 %v661, %v667
        %v670 = vpack.c.bf16 %v669, %v668
        %v671 = vlaneseq
        %v672 = vshrl.u32 %v671, 7
        %v673 = vsub.s32 1, %v672
        %v674 = vrot.slane %v600, %v673
        %676 = vrot.lane.b32.xlu0 %v674, 32
        %v677 = vpop.permute.xlu0 %676
        %v679 = vadd.f32 %v658, %v677
        %v680 = vadd.f32 %v661, %v677
        %v681 = vpack.c.bf16 %v680, %v679
        %v682 = vlaneseq
        %v683 = vshrl.u32 %v682, 7
        %v684 = vsub.s32 2, %v683
        %v685 = vrot.slane %v600, %v684
        %687 = vrot.lane.b32.xlu0 %v685, 64
        %v688 = vpop.permute.xlu0 %687
        %v690 = vadd.f32 %v658, %v688
        %v691 = vadd.f32 %v661, %v688
        %v692 = vpack.c.bf16 %v691, %v690
        %694 = vrot.lane.b32.xlu0 %v681, 96
        %v695 = vpop.permute.xlu0 %694
        %vm696 = vcmask 64512
        %v698 = vsel %vm696, %v670, 0
        %v701 = vsel %vm696, %v695, 0
        %703 = vmatprep.subr.bf16.mxu0 0
        %704 = vmatpush1.bf16.xpose.msra.mxu0 %v701
        %705 = vmatprep.subr.bf16.mxu0 0
        %706 = vmatpush1.bf16.xpose.msra.mxu0 0
        %707 = vmatprep.subr.bf16.mxu0 0
        %708 = vmatpush1.bf16.xpose.msra.mxu0 0
        %709 = vmatprep.subr.bf16.mxu0 0
        %710 = vmatpush1.bf16.xpose.msra.mxu0 0
        %711 = vmatprep.subr.bf16.mxu0 0
        %712 = vmatpush1.bf16.xpose.msra.mxu0 0
        %713 = vmatprep.subr.bf16.mxu0 0
        %714 = vmatpush1.bf16.xpose.msra.mxu0 0
        %715 = vmatprep.subr.bf16.mxu0 0
        %716 = vmatpush1.bf16.xpose.msra.mxu0 0
        %717 = vmatprep.subr.bf16.mxu0 0
        %718 = vmatpush1.bf16.xpose.msra.mxu0 0
        %719 = vmatprep.subr.bf16.mxu0 0
        %720 = vmatpush1.bf16.xpose.msra.mxu0 0
        %721 = vmatprep.subr.bf16.mxu0 0
        %722 = vmatpush1.bf16.xpose.msra.mxu0 0
        %723 = vmatprep.subr.bf16.mxu0 0
        %724 = vmatpush1.bf16.xpose.msra.mxu0 0
        %725 = vmatprep.subr.bf16.mxu0 0
        %726 = vmatpush1.bf16.xpose.msra.mxu0 0
        %727 = vmatprep.subr.bf16.mxu0 0
        %728 = vmatpush1.bf16.xpose.msra.mxu0 0
        %729 = vmatprep.subr.bf16.mxu0 0
        %730 = vmatpush1.bf16.xpose.msra.mxu0 0
        %731 = vmatprep.subr.bf16.mxu0 0
        %732 = vmatpush1.bf16.xpose.msra.mxu0 0
        %733 = vmatprep.subr.bf16.mxu0 0
        %734 = vmatpush1.bf16.xpose.msra.mxu0 0
        %735 = vmatprep.mubr.bf16.mxu0 0
        %736 = vmatmul.mubr.bf16.gmra.mrb[0].mxu0 %v698
        %v737 = vpop.f32.mrb[0].mxu0
        %v738 = vadd.f32 0.0, %v737
        %v739 = vpop.f32.mrb[0].mxu0
        %v740 = vpop.f32.mrb[0].mxu0
        %v741 = vadd.f32 0.0, %v740
        %v742 = vpop.f32.mrb[0].mxu0
        %743 = vdwg.mxu0
        %v744 = vmul.f32 %v738, 0.35355338
        %v745 = vmul.f32 %v741, 0.35355338
        %vm746 = vcmask 130048
        %v747 = vsel %vm746, %v744, -inf
        %748 = vmax.xlane.f32.xlu0 %v747
        %v749 = vpop.xlane.xlu0 %748
        %v750 = vsel %vm746, %v745, -inf
        %751 = vmax.xlane.f32.xlu0 %v750
        %v752 = vpop.xlane.xlu0 %751
        %v753 = vsub.f32 %v744, %v749
        %v754 = vsub.f32 %v745, %v752
        %v755 = vmul.f32 %v753, 1.442695
        %v756 = vpow.pop %v755
        %v757 = vmul.f32 %v754, 1.442695
        %v758 = vpow.pop %v757
        %v759 = vsel %vm746, %v756, 0.0
        %760 = vadd.xlane.f32.xlu0 %v759
        %v761 = vpop.xlane.xlu0 %760
        %v762 = vsel %vm746, %v758, 0.0
        %763 = vadd.xlane.f32.xlu0 %v762
        %v764 = vpop.xlane.xlu0 %763
        %v765 = vrcp.pop %v761
        %v766 = vmul.f32 %v756, %v765
        %v767 = vrcp.pop %v764
        %v768 = vmul.f32 %v758, %v767
        %v769 = vpack.c.bf16 %v768, %v766
        %771 = vrot.lane.b32.xlu0 %v692, 64
        %v772 = vpop.permute.xlu0 %771
        %v775 = vsel %vm746, %v769, 0
        %777 = vmatprep.subr.bf16.mxu0 0
        %778 = vmatpush1.bf16.msra.mxu0 %v772
        %779 = vmatprep.subr.bf16.mxu0 0
        %780 = vmatpush1.bf16.msra.mxu0 0
        %781 = vmatprep.subr.bf16.mxu0 0
        %782 = vmatpush1.bf16.msra.mxu0 0
        %783 = vmatprep.subr.bf16.mxu0 0
        %784 = vmatpush1.bf16.msra.mxu0 0
        %785 = vmatprep.subr.bf16.mxu0 0
        %786 = vmatpush1.bf16.msra.mxu0 0
        %787 = vmatprep.subr.bf16.mxu0 0
        %788 = vmatpush1.bf16.msra.mxu0 0
        %789 = vmatprep.subr.bf16.mxu0 0
        %790 = vmatpush1.bf16.msra.mxu0 0
        %791 = vmatprep.subr.bf16.mxu0 0
        %792 = vmatpush1.bf16.msra.mxu0 0
        %793 = vmatprep.subr.bf16.mxu0 0
        %794 = vmatpush1.bf16.msra.mxu0 0
        %795 = vmatprep.subr.bf16.mxu0 0
        %796 = vmatpush1.bf16.msra.mxu0 0
        %797 = vmatprep.subr.bf16.mxu0 0
        %798 = vmatpush1.bf16.msra.mxu0 0
        %799 = vmatprep.subr.bf16.mxu0 0
        %800 = vmatpush1.bf16.msra.mxu0 0
        %801 = vmatprep.subr.bf16.mxu0 0
        %802 = vmatpush1.bf16.msra.mxu0 0
        %803 = vmatprep.subr.bf16.mxu0 0
        %804 = vmatpush1.bf16.msra.mxu0 0
        %805 = vmatprep.subr.bf16.mxu0 0
        %806 = vmatpush1.bf16.msra.mxu0 0
        %807 = vmatprep.subr.bf16.mxu0 0
        %808 = vmatpush1.bf16.msra.mxu0 0
        %809 = vmatprep.mubr.bf16.mxu0 0
        %810 = vmatmul.mubr.bf16.gmra.mrb[0].mxu0 %v775
        %v811 = vpop.f32.mrb[0].mxu0
        %v812 = vadd.f32 0.0, %v811
        %v813 = vpop.f32.mrb[0].mxu0
        %v814 = vpop.f32.mrb[0].mxu0
        %v815 = vadd.f32 0.0, %v814
        %v816 = vpop.f32.mrb[0].mxu0
        %817 = vdwg.mxu0
        %819 = vrot.lane.b32.xlu0 %v670, 120
        %v820 = vpop.permute.xlu0 %819
        %821 = vrot.lane.b32.xlu0 %v681, 88
        %v822 = vpop.permute.xlu0 %821
        %v824 = vsel %vm696, %v820, 0
        %v827 = vsel %vm696, %v822, 0
        %829 = vmatprep.subr.bf16.mxu0 0
        %830 = vmatpush1.bf16.xpose.msra.mxu0 %v827
        %831 = vmatprep.subr.bf16.mxu0 0
        %832 = vmatpush1.bf16.xpose.msra.mxu0 0
        %833 = vmatprep.subr.bf16.mxu0 0
        %834 = vmatpush1.bf16.xpose.msra.mxu0 0
        %835 = vmatprep.subr.bf16.mxu0 0
        %836 = vmatpush1.bf16.xpose.msra.mxu0 0
        %837 = vmatprep.subr.bf16.mxu0 0
        %838 = vmatpush1.bf16.xpose.msra.mxu0 0
        %839 = vmatprep.subr.bf16.mxu0 0
        %840 = vmatpush1.bf16.xpose.msra.mxu0 0
        %841 = vmatprep.subr.bf16.mxu0 0
        %842 = vmatpush1.bf16.xpose.msra.mxu0 0
        %843 = vmatprep.subr.bf16.mxu0 0
        %844 = vmatpush1.bf16.xpose.msra.mxu0 0
        %845 = vmatprep.subr.bf16.mxu0 0
        %846 = vmatpush1.bf16.xpose.msra.mxu0 0
        %847 = vmatprep.subr.bf16.mxu0 0
        %848 = vmatpush1.bf16.xpose.msra.mxu0 0
        %849 = vmatprep.subr.bf16.mxu0 0
        %850 = vmatpush1.bf16.xpose.msra.mxu0 0
        %851 = vmatprep.subr.bf16.mxu0 0
        %852 = vmatpush1.bf16.xpose.msra.mxu0 0
        %853 = vmatprep.subr.bf16.mxu0 0
        %854 = vmatpush1.bf16.xpose.msra.mxu0 0
        %855 = vmatprep.subr.bf16.mxu0 0
        %856 = vmatpush1.bf16.xpose.msra.mxu0 0
        %857 = vmatprep.subr.bf16.mxu0 0
        %858 = vmatpush1.bf16.xpose.msra.mxu0 0
        %859 = vmatprep.subr.bf16.mxu0 0
        %860 = vmatpush1.bf16.xpose.msra.mxu0 0
        %861 = vmatprep.mubr.bf16.mxu0 0
        %862 = vmatmul.mubr.bf16.gmra.mrb[0].mxu0 %v824
        %v863 = vpop.f32.mrb[0].mxu0
        %v864 = vadd.f32 0.0, %v863
        %v865 = vpop.f32.mrb[0].mxu0
        %v866 = vpop.f32.mrb[0].mxu0
        %v867 = vadd.f32 0.0, %v866
        %v868 = vpop.f32.mrb[0].mxu0
        %869 = vdwg.mxu0
        %v870 = vmul.f32 %v864, 0.35355338
        %v871 = vmul.f32 %v867, 0.35355338
        %v872 = vsel %vm746, %v870, -inf
        %873 = vmax.xlane.f32.xlu0 %v872
        %v874 = vpop.xlane.xlu0 %873
        %v875 = vsel %vm746, %v871, -inf
        %876 = vmax.xlane.f32.xlu0 %v875
        %v877 = vpop.xlane.xlu0 %876
        %v878 = vsub.f32 %v870, %v874
        %v879 = vsub.f32 %v871, %v877
        %v880 = vmul.f32 %v878, 1.442695
        %v881 = vpow.pop %v880
        %v882 = vmul.f32 %v879, 1.442695
        %v883 = vpow.pop %v882
        %v884 = vsel %vm746, %v881, 0.0
        %885 = vadd.xlane.f32.xlu0 %v884
        %v886 = vpop.xlane.xlu0 %885
        %v887 = vsel %vm746, %v883, 0.0
        %888 = vadd.xlane.f32.xlu0 %v887
        %v889 = vpop.xlane.xlu0 %888
        %v890 = vrcp.pop %v886
        %v891 = vmul.f32 %v881, %v890
        %v892 = vrcp.pop %v889
        %v893 = vmul.f32 %v883, %v892
        %v894 = vpack.c.bf16 %v893, %v891
        %895 = vrot.lane.b32.xlu0 %v692, 56
        %v896 = vpop.permute.xlu0 %895
        %v899 = vsel %vm746, %v894, 0
        %901 = vmatprep.subr.bf16.mxu0 0
        %902 = vmatpush1.bf16.msra.mxu0 %v896
        %903 = vmatprep.subr.bf16.mxu0 0
        %904 = vmatpush1.bf16.msra.mxu0 0
        %905 = vmatprep.subr.bf16.mxu0 0
        %906 = vmatpush1.bf16.msra.mxu0 0
        %907 = vmatprep.subr.bf16.mxu0 0
        %908 = vmatpush1.bf16.msra.mxu0 0
        %909 = vmatprep.subr.bf16.mxu0 0
        %910 = vmatpush1.bf16.msra.mxu0 0
        %911 = vmatprep.subr.bf16.mxu0 0
        %912 = vmatpush1.bf16.msra.mxu0 0
        %913 = vmatprep.subr.bf16.mxu0 0
        %914 = vmatpush1.bf16.msra.mxu0 0
        %915 = vmatprep.subr.bf16.mxu0 0
        %916 = vmatpush1.bf16.msra.mxu0 0
        %917 = vmatprep.subr.bf16.mxu0 0
        %918 = vmatpush1.bf16.msra.mxu0 0
        %919 = vmatprep.subr.bf16.mxu0 0
        %920 = vmatpush1.bf16.msra.mxu0 0
        %921 = vmatprep.subr.bf16.mxu0 0
        %922 = vmatpush1.bf16.msra.mxu0 0
        %923 = vmatprep.subr.bf16.mxu0 0
        %924 = vmatpush1.bf16.msra.mxu0 0
        %925 = vmatprep.subr.bf16.mxu0 0
        %926 = vmatpush1.bf16.msra.mxu0 0
        %927 = vmatprep.subr.bf16.mxu0 0
        %928 = vmatpush1.bf16.msra.mxu0 0
        %929 = vmatprep.subr.bf16.mxu0 0
        %930 = vmatpush1.bf16.msra.mxu0 0
        %931 = vmatprep.subr.bf16.mxu0 0
        %932 = vmatpush1.bf16.msra.mxu0 0
        %933 = vmatprep.mubr.bf16.mxu0 0
        %934 = vmatmul.mubr.bf16.gmra.mrb[0].mxu0 %v899
        %v935 = vpop.f32.mrb[0].mxu0
        %v936 = vadd.f32 0.0, %v935
        %v937 = vpop.f32.mrb[0].mxu0
        %v938 = vpop.f32.mrb[0].mxu0
        %v939 = vadd.f32 0.0, %v938
        %v940 = vpop.f32.mrb[0].mxu0
        %941 = vdwg.mxu0
        %942 = vrot.lane.b32.xlu0 %v670, 112
        %v943 = vpop.permute.xlu0 %942
        %944 = vrot.lane.b32.xlu0 %v681, 80
        %v945 = vpop.permute.xlu0 %944
        %v947 = vsel %vm696, %v943, 0
        %v950 = vsel %vm696, %v945, 0
        %952 = vmatprep.subr.bf16.mxu0 0
        %953 = vmatpush1.bf16.xpose.msra.mxu0 %v950
        %954 = vmatprep.subr.bf16.mxu0 0
        %955 = vmatpush1.bf16.xpose.msra.mxu0 0
        %956 = vmatprep.subr.bf16.mxu0 0
        %957 = vmatpush1.bf16.xpose.msra.mxu0 0
        %958 = vmatprep.subr.bf16.mxu0 0
        %959 = vmatpush1.bf16.xpose.msra.mxu0 0
        %960 = vmatprep.subr.bf16.mxu0 0
        %961 = vmatpush1.bf16.xpose.msra.mxu0 0
        %962 = vmatprep.subr.bf16.mxu0 0
        %963 = vmatpush1.bf16.xpose.msra.mxu0 0
        %964 = vmatprep.subr.bf16.mxu0 0
        %965 = vmatpush1.bf16.xpose.msra.mxu0 0
        %966 = vmatprep.subr.bf16.mxu0 0
        %967 = vmatpush1.bf16.xpose.msra.mxu0 0
        %968 = vmatprep.subr.bf16.mxu0 0
        %969 = vmatpush1.bf16.xpose.msra.mxu0 0
        %970 = vmatprep.subr.bf16.mxu0 0
        %971 = vmatpush1.bf16.xpose.msra.mxu0 0
        %972 = vmatprep.subr.bf16.mxu0 0
        %973 = vmatpush1.bf16.xpose.msra.mxu0 0
        %974 = vmatprep.subr.bf16.mxu0 0
        %975 = vmatpush1.bf16.xpose.msra.mxu0 0
        %976 = vmatprep.subr.bf16.mxu0 0
        %977 = vmatpush1.bf16.xpose.msra.mxu0 0
        %978 = vmatprep.subr.bf16.mxu0 0
        %979 = vmatpush1.bf16.xpose.msra.mxu0 0
        %980 = vmatprep.subr.bf16.mxu0 0
        %981 = vmatpush1.bf16.xpose.msra.mxu0 0
        %982 = vmatprep.subr.bf16.mxu0 0
        %983 = vmatpush1.bf16.xpose.msra.mxu0 0
        %984 = vmatprep.mubr.bf16.mxu0 0
        %985 = vmatmul.mubr.bf16.gmra.mrb[0].mxu0 %v947
        %v986 = vpop.f32.mrb[0].mxu0
        %v987 = vadd.f32 0.0, %v986
        %v988 = vpop.f32.mrb[0].mxu0
        %v989 = vpop.f32.mrb[0].mxu0
        %v990 = vadd.f32 0.0, %v989
        %v991 = vpop.f32.mrb[0].mxu0
        %992 = vdwg.mxu0
        %v993 = vmul.f32 %v987, 0.35355338
        %v994 = vmul.f32 %v990, 0.35355338
        %v995 = vsel %vm746, %v993, -inf
        %996 = vmax.xlane.f32.xlu0 %v995
        %v997 = vpop.xlane.xlu0 %996
        %v998 = vsel %vm746, %v994, -inf
        %999 = vmax.xlane.f32.xlu0 %v998
        %v1000 = vpop.xlane.xlu0 %999
        %v1001 = vsub.f32 %v993, %v997
        %v1002 = vsub.f32 %v994, %v1000
        %v1003 = vmul.f32 %v1001, 1.442695
        %v1004 = vpow.pop %v1003
        %v1005 = vmul.f32 %v1002, 1.442695
        %v1006 = vpow.pop %v1005
        %v1007 = vsel %vm746, %v1004, 0.0
        %1008 = vadd.xlane.f32.xlu0 %v1007
        %v1009 = vpop.xlane.xlu0 %1008
        %v1010 = vsel %vm746, %v1006, 0.0
        %1011 = vadd.xlane.f32.xlu0 %v1010
        %v1012 = vpop.xlane.xlu0 %1011
        %v1013 = vrcp.pop %v1009
        %v1014 = vmul.f32 %v1004, %v1013
        %v1015 = vrcp.pop %v1012
        %v1016 = vmul.f32 %v1006, %v1015
        %v1017 = vpack.c.bf16 %v1016, %v1014
        %1018 = vrot.lane.b32.xlu0 %v692, 48
        %v1019 = vpop.permute.xlu0 %1018
        %v1022 = vsel %vm746, %v1017, 0
        %1024 = vmatprep.subr.bf16.mxu0 0
        %1025 = vmatpush1.bf16.msra.mxu0 %v1019
        %1026 = vmatprep.subr.bf16.mxu0 0
        %1027 = vmatpush1.bf16.msra.mxu0 0
        %1028 = vmatprep.subr.bf16.mxu0 0
        %1029 = vmatpush1.bf16.msra.mxu0 0
        %1030 = vmatprep.subr.bf16.mxu0 0
        %1031 = vmatpush1.bf16.msra.mxu0 0
        %1032 = vmatprep.subr.bf16.mxu0 0
        %1033 = vmatpush1.bf16.msra.mxu0 0
        %1034 = vmatprep.subr.bf16.mxu0 0
        %1035 = vmatpush1.bf16.msra.mxu0 0
        %1036 = vmatprep.subr.bf16.mxu0 0
        %1037 = vmatpush1.bf16.msra.mxu0 0
        %1038 = vmatprep.subr.bf16.mxu0 0
        %1039 = vmatpush1.bf16.msra.mxu0 0
        %1040 = vmatprep.subr.bf16.mxu0 0
        %1041 = vmatpush1.bf16.msra.mxu0 0
        %1042 = vmatprep.subr.bf16.mxu0 0
        %1043 = vmatpush1.bf16.msra.mxu0 0
        %1044 = vmatprep.subr.bf16.mxu0 0
        %1045 = vmatpush1.bf16.msra.mxu0 0
        %1046 = vmatprep.subr.bf16.mxu0 0
        %1047 = vmatpush1.bf16.msra.mxu0 0
        %1048 = vmatprep.subr.bf16.mxu0 0
        %1049 = vmatpush1.bf16.msra.mxu0 0
        %1050 = vmatprep.subr.bf16.mxu0 0
        %1051 = vmatpush1.bf16.msra.mxu0 0
        %1052 = vmatprep.subr.bf16.mxu0 0
        %1053 = vmatpush1.bf16.msra.mxu0 0
        %1054 = vmatprep.subr.bf16.mxu0 0
        %1055 = vmatpush1.bf16.msra.mxu0 0
        %1056 = vmatprep.mubr.bf16.mxu0 0
        %1057 = vmatmul.mubr.bf16.gmra.mrb[0].mxu0 %v1022
        %v1058 = vpop.f32.mrb[0].mxu0
        %v1059 = vadd.f32 0.0, %v1058
        %v1060 = vpop.f32.mrb[0].mxu0
        %v1061 = vpop.f32.mrb[0].mxu0
        %v1062 = vadd.f32 0.0, %v1061
        %v1063 = vpop.f32.mrb[0].mxu0
        %1064 = vdwg.mxu0
        %1065 = vrot.lane.b32.xlu0 %v670, 104
        %v1066 = vpop.permute.xlu0 %1065
        %1067 = vrot.lane.b32.xlu0 %v681, 72
        %v1068 = vpop.permute.xlu0 %1067
        %v1070 = vsel %vm696, %v1066, 0
        %v1073 = vsel %vm696, %v1068, 0
        %1075 = vmatprep.subr.bf16.mxu0 0
        %1076 = vmatpush1.bf16.xpose.msra.mxu0 %v1073
        %1077 = vmatprep.subr.bf16.mxu0 0
        %1078 = vmatpush1.bf16.xpose.msra.mxu0 0
        %1079 = vmatprep.subr.bf16.mxu0 0
        %1080 = vmatpush1.bf16.xpose.msra.mxu0 0
        %1081 = vmatprep.subr.bf16.mxu0 0
        %1082 = vmatpush1.bf16.xpose.msra.mxu0 0
        %1083 = vmatprep.subr.bf16.mxu0 0
        %1084 = vmatpush1.bf16.xpose.msra.mxu0 0
        %1085 = vmatprep.subr.bf16.mxu0 0
        %1086 = vmatpush1.bf16.xpose.msra.mxu0 0
        %1087 = vmatprep.subr.bf16.mxu0 0
        %1088 = vmatpush1.bf16.xpose.msra.mxu0 0
        %1089 = vmatprep.subr.bf16.mxu0 0
        %1090 = vmatpush1.bf16.xpose.msra.mxu0 0
        %1091 = vmatprep.subr.bf16.mxu0 0
        %1092 = vmatpush1.bf16.xpose.msra.mxu0 0
        %1093 = vmatprep.subr.bf16.mxu0 0
        %1094 = vmatpush1.bf16.xpose.msra.mxu0 0
        %1095 = vmatprep.subr.bf16.mxu0 0
        %1096 = vmatpush1.bf16.xpose.msra.mxu0 0
        %1097 = vmatprep.subr.bf16.mxu0 0
        %1098 = vmatpush1.bf16.xpose.msra.mxu0 0
        %1099 = vmatprep.subr.bf16.mxu0 0
        %1100 = vmatpush1.bf16.xpose.msra.mxu0 0
        %1101 = vmatprep.subr.bf16.mxu0 0
        %1102 = vmatpush1.bf16.xpose.msra.mxu0 0
        %1103 = vmatprep.subr.bf16.mxu0 0
        %1104 = vmatpush1.bf16.xpose.msra.mxu0 0
        %1105 = vmatprep.subr.bf16.mxu0 0
        %1106 = vmatpush1.bf16.xpose.msra.mxu0 0
        %1107 = vmatprep.mubr.bf16.mxu0 0
        %1108 = vmatmul.mubr.bf16.gmra.mrb[0].mxu0 %v1070
        %v1109 = vpop.f32.mrb[0].mxu0
        %v1110 = vadd.f32 0.0, %v1109
        %v1111 = vpop.f32.mrb[0].mxu0
        %v1112 = vpop.f32.mrb[0].mxu0
        %v1113 = vadd.f32 0.0, %v1112
        %v1114 = vpop.f32.mrb[0].mxu0
        %1115 = vdwg.mxu0
        %v1116 = vmul.f32 %v1110, 0.35355338
        %v1117 = vmul.f32 %v1113, 0.35355338
        %v1118 = vsel %vm746, %v1116, -inf
        %1119 = vmax.xlane.f32.xlu0 %v1118
        %v1120 = vpop.xlane.xlu0 %1119
        %v1121 = vsel %vm746, %v1117, -inf
        %1122 = vmax.xlane.f32.xlu0 %v1121
        %v1123 = vpop.xlane.xlu0 %1122
        %v1124 = vsub.f32 %v1116, %v1120
        %v1125 = vsub.f32 %v1117, %v1123
        %v1126 = vmul.f32 %v1124, 1.442695
        %v1127 = vpow.pop %v1126
        %v1128 = vmul.f32 %v1125, 1.442695
        %v1129 = vpow.pop %v1128
        %v1130 = vsel %vm746, %v1127, 0.0
        %1131 = vadd.xlane.f32.xlu0 %v1130
        %v1132 = vpop.xlane.xlu0 %1131
        %v1133 = vsel %vm746, %v1129, 0.0
        %1134 = vadd.xlane.f32.xlu0 %v1133
        %v1135 = vpop.xlane.xlu0 %1134
        %v1136 = vrcp.pop %v1132
        %v1137 = vmul.f32 %v1127, %v1136
        %v1138 = vrcp.pop %v1135
        %v1139 = vmul.f32 %v1129, %v1138
        %v1140 = vpack.c.bf16 %v1139, %v1137
        %1141 = vrot.lane.b32.xlu0 %v692, 40
        %v1142 = vpop.permute.xlu0 %1141
        %v1145 = vsel %vm746, %v1140, 0
        %1147 = vmatprep.subr.bf16.mxu0 0
        %1148 = vmatpush1.bf16.msra.mxu0 %v1142
        %1149 = vmatprep.subr.bf16.mxu0 0
        %1150 = vmatpush1.bf16.msra.mxu0 0
        %1151 = vmatprep.subr.bf16.mxu0 0
        %1152 = vmatpush1.bf16.msra.mxu0 0
        %1153 = vmatprep.subr.bf16.mxu0 0
        %1154 = vmatpush1.bf16.msra.mxu0 0
        %1155 = vmatprep.subr.bf16.mxu0 0
        %1156 = vmatpush1.bf16.msra.mxu0 0
        %1157 = vmatprep.subr.bf16.mxu0 0
        %1158 = vmatpush1.bf16.msra.mxu0 0
        %1159 = vmatprep.subr.bf16.mxu0 0
        %1160 = vmatpush1.bf16.msra.mxu0 0
        %1161 = vmatprep.subr.bf16.mxu0 0
        %1162 = vmatpush1.bf16.msra.mxu0 0
        %1163 = vmatprep.subr.bf16.mxu0 0
        %1164 = vmatpush1.bf16.msra.mxu0 0
        %1165 = vmatprep.subr.bf16.mxu0 0
        %1166 = vmatpush1.bf16.msra.mxu0 0
        %1167 = vmatprep.subr.bf16.mxu0 0
        %1168 = vmatpush1.bf16.msra.mxu0 0
        %1169 = vmatprep.subr.bf16.mxu0 0
        %1170 = vmatpush1.bf16.msra.mxu0 0
        %1171 = vmatprep.subr.bf16.mxu0 0
        %1172 = vmatpush1.bf16.msra.mxu0 0
        %1173 = vmatprep.subr.bf16.mxu0 0
        %1174 = vmatpush1.bf16.msra.mxu0 0
        %1175 = vmatprep.subr.bf16.mxu0 0
        %1176 = vmatpush1.bf16.msra.mxu0 0
        %1177 = vmatprep.subr.bf16.mxu0 0
        %1178 = vmatpush1.bf16.msra.mxu0 0
        %1179 = vmatprep.mubr.bf16.mxu0 0
        %1180 = vmatmul.mubr.bf16.gmra.mrb[0].mxu0 %v1145
        %v1181 = vpop.f32.mrb[0].mxu0
        %v1182 = vadd.f32 0.0, %v1181
        %v1183 = vpop.f32.mrb[0].mxu0
        %v1184 = vpop.f32.mrb[0].mxu0
        %v1185 = vadd.f32 0.0, %v1184
        %v1186 = vpop.f32.mrb[0].mxu0
        %1187 = vdwg.mxu0
        %1190 = vrot.lane.b32.xlu0 %v936, 8
        %v1191 = vpop.permute.xlu0 %1190
        %1192 = vrot.lane.b32.xlu0 %v939, 8
        %v1193 = vpop.permute.xlu0 %1192
        %1198 = vrot.lane.b32.xlu0 %v1059, 16
        %v1199 = vpop.permute.xlu0 %1198
        %1200 = vrot.lane.b32.xlu0 %v1062, 16
        %v1201 = vpop.permute.xlu0 %1200
        %1206 = vrot.lane.b32.xlu0 %v1182, 24
        %v1207 = vpop.permute.xlu0 %1206
        %1208 = vrot.lane.b32.xlu0 %v1185, 24
        %v1209 = vpop.permute.xlu0 %1208
        %v1212 = vsel %vm696, %v812, %v1191
        %v1213 = vsel %vm696, %v815, %v1193
        %v1214 = vsel %vm746, %v1212, %v1199
        %v1215 = vsel %vm746, %v1213, %v1201
        %vm1216 = vcmask 195584
        %v1217 = vsel %vm1216, %v1214, %v1207
        %v1218 = vsel %vm1216, %v1215, %v1209
        %v1219 = vpack.c.bf16 %v1218, %v1217
        %v1220 = vld [vmem:[%s483] sm:$0xf]
        %v1221 = vld [vmem:[%s483 + $0x4] sm:$0xf]
        %v1222 = vld [vmem:[%s483 + $0x8] sm:$0xf]
        %v1223 = vld [vmem:[%s483 + $0xc] sm:$0xf]
        %v1224 = vlaneseq
        %v1225 = vshrl.u32 %v1224, 7
        %v1226 = vsub.s32 3, %v1225
        %v1227 = vrot.slane %v600, %v1226
        %v1232 = vunpack.c.l.b16 %v1220
        %v1233 = vunpack.c.l.b16 %v1221
        %v1234 = vunpack.c.l.b16 %v1222
        %v1235 = vunpack.c.l.b16 %v1223
        %v1236 = vpack.c.b16 %v1233, %v1232
        %v1237 = vpack.c.b16 %v1235, %v1234
        %v1241 = vsel %vm619, %v1219, 0
        %1243 = vmatprep.subr.bf16.mxu0 0
        %1244 = vmatpush1.bf16.msra.mxu0 %v1236
        %1245 = vmatprep.subr.bf16.mxu0 0
        %1246 = vmatpush1.bf16.msra.mxu0 %v1237
        %1247 = vmatprep.subr.bf16.mxu0 0
        %1248 = vmatpush1.bf16.msra.mxu0 0
        %1249 = vmatprep.subr.bf16.mxu0 0
        %1250 = vmatpush1.bf16.msra.mxu0 0
        %1251 = vmatprep.subr.bf16.mxu0 0
        %1252 = vmatpush1.bf16.msra.mxu0 0
        %1253 = vmatprep.subr.bf16.mxu0 0
        %1254 = vmatpush1.bf16.msra.mxu0 0
        %1255 = vmatprep.subr.bf16.mxu0 0
        %1256 = vmatpush1.bf16.msra.mxu0 0
        %1257 = vmatprep.subr.bf16.mxu0 0
        %1258 = vmatpush1.bf16.msra.mxu0 0
        %1259 = vmatprep.subr.bf16.mxu0 0
        %1260 = vmatpush1.bf16.msra.mxu0 0
        %1261 = vmatprep.subr.bf16.mxu0 0
        %1262 = vmatpush1.bf16.msra.mxu0 0
        %1263 = vmatprep.subr.bf16.mxu0 0
        %1264 = vmatpush1.bf16.msra.mxu0 0
        %1265 = vmatprep.subr.bf16.mxu0 0
        %1266 = vmatpush1.bf16.msra.mxu0 0
        %1267 = vmatprep.subr.bf16.mxu0 0
        %1268 = vmatpush1.bf16.msra.mxu0 0
        %1269 = vmatprep.subr.bf16.mxu0 0
        %1270 = vmatpush1.bf16.msra.mxu0 0
        %1271 = vmatprep.subr.bf16.mxu0 0
        %1272 = vmatpush1.bf16.msra.mxu0 0
        %1273 = vmatprep.subr.bf16.mxu0 0
        %1274 = vmatpush1.bf16.msra.mxu0 0
        %1275 = vmatprep.mubr.bf16.mxu0 0
        %1276 = vmatmul.mubr.bf16.gmra.mrb[0].mxu0 %v1241
        %v1277 = vpop.f32.mrb[0].mxu0
        %v1278 = vadd.f32 %v1227, %v1277
        %v1279 = vpop.f32.mrb[0].mxu0
        %v1280 = vpop.f32.mrb[0].mxu0
        %v1281 = vadd.f32 %v1227, %v1280
        %v1282 = vpop.f32.mrb[0].mxu0
        %1283 = vdwg.mxu0
        %v1284 = vadd.f32 %v598, %v1278
        %v1285 = vadd.f32 %v599, %v1281
        %v1286 = vsel %vm619, %v1284, 0.0
        %1287 = vadd.xlane.f32.xlu0 %v1286
        %v1288 = vpop.xlane.xlu0 %1287
        %v1289 = vsel %vm619, %v1285, 0.0
        %1290 = vadd.xlane.f32.xlu0 %v1289
        %v1291 = vpop.xlane.xlu0 %1290
        %v1292 = vrcp.pop 32.0
        %v1293 = vmul.f32 %v1288, %v1292
        %v1294 = vmul.f32 %v1291, %v1292
        %v1295 = vmul.f32 %v1284, %v1284
        %v1296 = vmul.f32 %v1285, %v1285
        %v1297 = vsel %vm619, %v1295, 0.0
        %1298 = vadd.xlane.f32.xlu0 %v1297
        %v1299 = vpop.xlane.xlu0 %1298
        %v1300 = vsel %vm619, %v1296, 0.0
        %1301 = vadd.xlane.f32.xlu0 %v1300
        %v1302 = vpop.xlane.xlu0 %1301
        %v1303 = vmul.f32 %v1299, %v1292
        %v1304 = vmul.f32 %v1302, %v1292
        %v1305 = vsub.f32 %v1284, %v1293
        %v1306 = vsub.f32 %v1285, %v1294
        %v1307 = vmul.f32 %v1293, %v1293
        %v1308 = vmul.f32 %v1294, %v1294
        %v1309 = vsub.f32 %v1303, %v1307
        %v1310 = vsub.f32 %v1304, %v1308
        %v1311 = vadd.f32 %v1309, 1e-05
        %v1312 = vadd.f32 %v1310, 1e-05
        %v1313 = vrsqrt.pop %v1311
        %v1314 = vrsqrt.pop %v1312
        %v1315 = vmul.f32 %v1305, %v1313
        %v1316 = vmul.f32 %v1306, %v1314
        %v1317 = vlaneseq
        %v1318 = vshrl.u32 %v1317, 7
        %v1319 = vsub.s32 6, %v1318
        %v1320 = vrot.slane %v600, %v1319
        %v1321 = vmul.f32 %v1315, %v1320
        %v1322 = vmul.f32 %v1316, %v1320
        %v1323 = vlaneseq
        %v1324 = vshrl.u32 %v1323, 7
        %v1325 = vsub.s32 7, %v1324
        %v1326 = vrot.slane %v600, %v1325
        %v1327 = vadd.f32 %v1321, %v1326
        %v1328 = vadd.f32 %v1322, %v1326
        %v1329 = vpack.c.bf16 %v1328, %v1327
        %v1330 = vld [vmem:[%s401] sm:$0xf]
        %v1331 = vld [vmem:[%s401 + $0x4] sm:$0xf]
        %v1332 = vld [vmem:[%s401 + $0x8] sm:$0xf]
        %v1333 = vld [vmem:[%s401 + $0xc] sm:$0xf]
        %v1334 = vlaneseq
        %v1335 = vshrl.u32 %v1334, 7
        %v1336 = vsub.s32 4, %v1335
        %v1337 = vrot.slane %v600, %v1336
        %v1342 = vunpack.c.l.b16 %v1330
        %v1343 = vunpack.c.l.b16 %v1331
        %v1344 = vunpack.c.l.b16 %v1332
        %v1345 = vunpack.c.l.b16 %v1333
        %v1346 = vpack.c.b16 %v1343, %v1342
        %v1347 = vpack.c.b16 %v1345, %v1344
        %v1351 = vsel %vm619, %v1329, 0
        %1353 = vmatprep.subr.bf16.mxu0 0
        %1354 = vmatpush1.bf16.msra.mxu0 %v1346
        %1355 = vmatprep.subr.bf16.mxu0 0
        %1356 = vmatpush1.bf16.msra.mxu0 %v1347
        %1357 = vmatprep.subr.bf16.mxu0 0
        %1358 = vmatpush1.bf16.msra.mxu0 0
        %1359 = vmatprep.subr.bf16.mxu0 0
        %1360 = vmatpush1.bf16.msra.mxu0 0
        %1361 = vmatprep.subr.bf16.mxu0 0
        %1362 = vmatpush1.bf16.msra.mxu0 0
        %1363 = vmatprep.subr.bf16.mxu0 0
        %1364 = vmatpush1.bf16.msra.mxu0 0
        %1365 = vmatprep.subr.bf16.mxu0 0
        %1366 = vmatpush1.bf16.msra.mxu0 0
        %1367 = vmatprep.subr.bf16.mxu0 0
        %1368 = vmatpush1.bf16.msra.mxu0 0
        %1369 = vmatprep.subr.bf16.mxu0 0
        %1370 = vmatpush1.bf16.msra.mxu0 0
        %1371 = vmatprep.subr.bf16.mxu0 0
        %1372 = vmatpush1.bf16.msra.mxu0 0
        %1373 = vmatprep.subr.bf16.mxu0 0
        %1374 = vmatpush1.bf16.msra.mxu0 0
        %1375 = vmatprep.subr.bf16.mxu0 0
        %1376 = vmatpush1.bf16.msra.mxu0 0
        %1377 = vmatprep.subr.bf16.mxu0 0
        %1378 = vmatpush1.bf16.msra.mxu0 0
        %1379 = vmatprep.subr.bf16.mxu0 0
        %1380 = vmatpush1.bf16.msra.mxu0 0
        %1381 = vmatprep.subr.bf16.mxu0 0
        %1382 = vmatpush1.bf16.msra.mxu0 0
        %1383 = vmatprep.subr.bf16.mxu0 0
        %1384 = vmatpush1.bf16.msra.mxu0 0
        %1385 = vmatprep.mubr.bf16.mxu0 0
        %1386 = vmatmul.mubr.bf16.gmra.mrb[0].mxu0 %v1351
        %v1387 = vpop.f32.mrb[0].mxu0
        %v1388 = vadd.f32 %v1337, %v1387
        %v1389 = vpop.f32.mrb[0].mxu0
        %v1390 = vpop.f32.mrb[0].mxu0
        %v1391 = vadd.f32 %v1337, %v1390
        %v1392 = vpop.f32.mrb[0].mxu0
        %1393 = vdwg.mxu0
        %v1394 = vmax.f32 %v1388, 0.0
        %v1395 = vmax.f32 %v1391, 0.0
        %v1396 = vpack.c.bf16 %v1395, %v1394
        %v1397 = vld [vmem:[%s410] sm:$0xf]
        %v1398 = vld [vmem:[%s410 + $0x4] sm:$0xf]
        %v1399 = vld [vmem:[%s410 + $0x8] sm:$0xf]
        %v1400 = vld [vmem:[%s410 + $0xc] sm:$0xf]
        %v1401 = vlaneseq
        %v1402 = vshrl.u32 %v1401, 7
        %v1403 = vsub.s32 5, %v1402
        %v1404 = vrot.slane %v600, %v1403
        %v1409 = vunpack.c.l.b16 %v1397
        %v1410 = vunpack.c.l.b16 %v1398
        %v1411 = vunpack.c.l.b16 %v1399
        %v1412 = vunpack.c.l.b16 %v1400
        %v1413 = vpack.c.b16 %v1410, %v1409
        %v1414 = vpack.c.b16 %v1412, %v1411
        %v1418 = vsel %vm619, %v1396, 0
        %1420 = vmatprep.subr.bf16.mxu0 0
        %1421 = vmatpush1.bf16.msra.mxu0 %v1413
        %1422 = vmatprep.subr.bf16.mxu0 0
        %1423 = vmatpush1.bf16.msra.mxu0 %v1414
        %1424 = vmatprep.subr.bf16.mxu0 0
        %1425 = vmatpush1.bf16.msra.mxu0 0
        %1426 = vmatprep.subr.bf16.mxu0 0
        %1427 = vmatpush1.bf16.msra.mxu0 0
        %1428 = vmatprep.subr.bf16.mxu0 0
        %1429 = vmatpush1.bf16.msra.mxu0 0
        %1430 = vmatprep.subr.bf16.mxu0 0
        %1431 = vmatpush1.bf16.msra.mxu0 0
        %1432 = vmatprep.subr.bf16.mxu0 0
        %1433 = vmatpush1.bf16.msra.mxu0 0
        %1434 = vmatprep.subr.bf16.mxu0 0
        %1435 = vmatpush1.bf16.msra.mxu0 0
        %1436 = vmatprep.subr.bf16.mxu0 0
        %1437 = vmatpush1.bf16.msra.mxu0 0
        %1438 = vmatprep.subr.bf16.mxu0 0
        %1439 = vmatpush1.bf16.msra.mxu0 0
        %1440 = vmatprep.subr.bf16.mxu0 0
        %1441 = vmatpush1.bf16.msra.mxu0 0
        %1442 = vmatprep.subr.bf16.mxu0 0
        %1443 = vmatpush1.bf16.msra.mxu0 0
        %1444 = vmatprep.subr.bf16.mxu0 0
        %1445 = vmatpush1.bf16.msra.mxu0 0
        %1446 = vmatprep.subr.bf16.mxu0 0
        %1447 = vmatpush1.bf16.msra.mxu0 0
        %1448 = vmatprep.subr.bf16.mxu0 0
        %1449 = vmatpush1.bf16.msra.mxu0 0
        %1450 = vmatprep.subr.bf16.mxu0 0
        %1451 = vmatpush1.bf16.msra.mxu0 0
        %1452 = vmatprep.mubr.bf16.mxu0 0
        %1453 = vmatmul.mubr.bf16.gmra.mrb[0].mxu0 %v1418
        %v1454 = vpop.f32.mrb[0].mxu0
        %v1455 = vadd.f32 %v1404, %v1454
        %v1456 = vpop.f32.mrb[0].mxu0
        %v1457 = vpop.f32.mrb[0].mxu0
        %v1458 = vadd.f32 %v1404, %v1457
        %v1459 = vpop.f32.mrb[0].mxu0
        %1460 = vdwg.mxu0
        %v1461 = vadd.f32 %v1327, %v1455
        %v1462 = vadd.f32 %v1328, %v1458
        %v1463 = vsel %vm619, %v1461, 0.0
        %1464 = vadd.xlane.f32.xlu0 %v1463
        %v1465 = vpop.xlane.xlu0 %1464
        %v1466 = vsel %vm619, %v1462, 0.0
        %1467 = vadd.xlane.f32.xlu0 %v1466
        %v1468 = vpop.xlane.xlu0 %1467
        %v1469 = vmul.f32 %v1465, %v1292
        %v1470 = vmul.f32 %v1468, %v1292
        %v1471 = vmul.f32 %v1461, %v1461
        %v1472 = vmul.f32 %v1462, %v1462
        %v1473 = vsel %vm619, %v1471, 0.0
        %1474 = vadd.xlane.f32.xlu0 %v1473
        %v1475 = vpop.xlane.xlu0 %1474
        %v1476 = vsel %vm619, %v1472, 0.0
        %1477 = vadd.xlane.f32.xlu0 %v1476
        %v1478 = vpop.xlane.xlu0 %1477
        %v1479 = vmul.f32 %v1475, %v1292
        %v1480 = vmul.f32 %v1478, %v1292
        %v1481 = vsub.f32 %v1461, %v1469
        %v1482 = vsub.f32 %v1462, %v1470
        %v1483 = vmul.f32 %v1469, %v1469
        %v1484 = vmul.f32 %v1470, %v1470
        %v1485 = vsub.f32 %v1479, %v1483
        %v1486 = vsub.f32 %v1480, %v1484
        %v1487 = vadd.f32 %v1485, 1e-05
        %v1488 = vadd.f32 %v1486, 1e-05
        %v1489 = vrsqrt.pop %v1487
        %v1490 = vrsqrt.pop %v1488
        %v1491 = vmul.f32 %v1481, %v1489
        %v1492 = vmul.f32 %v1482, %v1490
        %v1493 = vlaneseq
        %v1494 = vshrl.u32 %v1493, 7
        %v1495 = vsub.s32 0, %v1494
        %v1496 = vrot.slane %v601, %v1495
        %v1497 = vmul.f32 %v1491, %v1496
        %v1498 = vmul.f32 %v1492, %v1496
        %v1499 = vlaneseq
        %v1500 = vshrl.u32 %v1499, 7
        %v1501 = vsub.s32 1, %v1500
        %v1502 = vrot.slane %v601, %v1501
        %v1503 = vadd.f32 %v1497, %v1502
        %v1504 = vadd.f32 %v1498, %v1502
        %v1505 = vld [vmem:[%s419] sm:$0xf]
        %v1506 = vld [vmem:[%s419 + $0x4] sm:$0xf]
        %v1507 = vpack.c.bf16 %v1504, %v1503
        %v1510 = vunpack.c.l.b16 %v1505
        %v1511 = vunpack.c.l.b16 %v1506
        %v1512 = vpack.c.b16 %v1511, %v1510
        %v1514 = vsel %vm746, %v1512, 0
        %1516 = vmatprep.subr.bf16.mxu0 0
        %1517 = vmatpush1.bf16.msra.mxu0 %v1507
        %1518 = vmatprep.subr.bf16.mxu0 0
        %1519 = vmatpush1.bf16.msra.mxu0 0
        %1520 = vmatprep.subr.bf16.mxu0 0
        %1521 = vmatpush1.bf16.msra.mxu0 0
        %1522 = vmatprep.subr.bf16.mxu0 0
        %1523 = vmatpush1.bf16.msra.mxu0 0
        %1524 = vmatprep.subr.bf16.mxu0 0
        %1525 = vmatpush1.bf16.msra.mxu0 0
        %1526 = vmatprep.subr.bf16.mxu0 0
        %1527 = vmatpush1.bf16.msra.mxu0 0
        %1528 = vmatprep.subr.bf16.mxu0 0
        %1529 = vmatpush1.bf16.msra.mxu0 0
        %1530 = vmatprep.subr.bf16.mxu0 0
        %1531 = vmatpush1.bf16.msra.mxu0 0
        %1532 = vmatprep.subr.bf16.mxu0 0
        %1533 = vmatpush1.bf16.msra.mxu0 0
        %1534 = vmatprep.subr.bf16.mxu0 0
        %1535 = vmatpush1.bf16.msra.mxu0 0
        %1536 = vmatprep.subr.bf16.mxu0 0
        %1537 = vmatpush1.bf16.msra.mxu0 0
        %1538 = vmatprep.subr.bf16.mxu0 0
        %1539 = vmatpush1.bf16.msra.mxu0 0
        %1540 = vmatprep.subr.bf16.mxu0 0
        %1541 = vmatpush1.bf16.msra.mxu0 0
        %1542 = vmatprep.subr.bf16.mxu0 0
        %1543 = vmatpush1.bf16.msra.mxu0 0
        %1544 = vmatprep.subr.bf16.mxu0 0
        %1545 = vmatpush1.bf16.msra.mxu0 0
        %1546 = vmatprep.subr.bf16.mxu0 0
        %1547 = vmatpush1.bf16.msra.mxu0 0
        %1548 = vmatprep.mubr.bf16.mxu0 0
        %1549 = vmatmul.mubr.bf16.gmra.mrb[0].mxu0 %v1514
        %v1550 = vpop.f32.mrb[0].mxu0
        %v1551 = vadd.f32 0.0, %v1550
        %v1552 = vpop.f32.mrb[0].mxu0
        %v1553 = vpop.f32.mrb[0].mxu0
        %v1554 = vadd.f32 0.0, %v1553
        %v1555 = vpop.f32.mrb[0].mxu0
        %1556 = vdwg.mxu0
        %v1557 = vadd.f32 %v1503, %v1551
        %v1558 = vadd.f32 %v1504, %v1554
        %v1559 = vsel %vm619, %v1557, 0.0
        %1560 = vadd.xlane.f32.xlu0 %v1559
        %v1561 = vpop.xlane.xlu0 %1560
        %v1562 = vsel %vm619, %v1558, 0.0
        %1563 = vadd.xlane.f32.xlu0 %v1562
        %v1564 = vpop.xlane.xlu0 %1563
        %v1565 = vmul.f32 %v1561, %v1292
        %v1566 = vmul.f32 %v1564, %v1292
        %v1567 = vmul.f32 %v1557, %v1557
        %v1568 = vmul.f32 %v1558, %v1558
        %v1569 = vsel %vm619, %v1567, 0.0
        %1570 = vadd.xlane.f32.xlu0 %v1569
        %v1571 = vpop.xlane.xlu0 %1570
        %v1572 = vsel %vm619, %v1568, 0.0
        %1573 = vadd.xlane.f32.xlu0 %v1572
        %v1574 = vpop.xlane.xlu0 %1573
        %v1575 = vmul.f32 %v1571, %v1292
        %v1576 = vmul.f32 %v1574, %v1292
        %v1577 = vsub.f32 %v1557, %v1565
        %v1578 = vsub.f32 %v1558, %v1566
        %v1579 = vmul.f32 %v1565, %v1565
        %v1580 = vmul.f32 %v1566, %v1566
        %v1581 = vsub.f32 %v1575, %v1579
        %v1582 = vsub.f32 %v1576, %v1580
        %v1583 = vadd.f32 %v1581, 1e-05
        %v1584 = vadd.f32 %v1582, 1e-05
        %v1585 = vrsqrt.pop %v1583
        %v1586 = vrsqrt.pop %v1584
        %v1587 = vmul.f32 %v1577, %v1585
        %v1588 = vmul.f32 %v1578, %v1586
        %v1589 = vlaneseq
        %v1590 = vshrl.u32 %v1589, 7
        %v1591 = vsub.s32 2, %v1590
        %v1592 = vrot.slane %v601, %v1591
        %v1593 = vmul.f32 %v1587, %v1592
        %v1594 = vmul.f32 %v1588, %v1592
        %v1595 = vlaneseq
        %v1596 = vshrl.u32 %v1595, 7
        %v1597 = vsub.s32 3, %v1596
        %v1598 = vrot.slane %v601, %v1597
        %v1599 = vadd.f32 %v1593, %v1598
        %v1600 = vadd.f32 %v1594, %v1598
        %v1601 = vadd.f32 %v1599, %v598
        %v1602 = vadd.f32 %v1600, %v599
        %1603 = vst.msk [vmem:[#allocation2] sm:$0xff] %vm619, %v1601
        %1604 = vst.msk [vmem:[#allocation2 + $0x8] sm:$0xff] %vm619, %v1602
        %p1605 = scmp.eq.s32.totalorder %s28, 1
        // Predicated region
        $region77: #{forward.1} parent=55 // pred_check
          %p1606 = pneg %p1605
        $region78: #{forward.1} parent=55 // pred_check_branch
          %1608 = sbr.rel (%p1606) target = $region80
        $region79: #{forward.1} parent=55 // pred_region
          %1609 = vst.msk [vmem:[#allocation11] sm:$0xff] %vm619, %v1601
          %1610 = vst.msk [vmem:[#allocation11 + $0x8] sm:$0xff] %vm619, %v1602
        $region80: #{forward.1} parent=55 // pred_fallthru
          _
        // Predicated region
        $region81: #{forward.1} parent=55 // pred_check
          %p1611 = pneg %p260
        $region82: #{forward.1} parent=55 // pred_check_branch
          %1613 = sbr.rel (%p1611) target = $region84
        $region83: #{forward.1} parent=55 // pred_region
          %s1615 = ssub.s32 256, 256
          %1616 = vsyncadd [#allocation5], %s1615
          %s1617 = sshll.u32 [#allocation11], 4
          %s1618 = int_to_ptr.vmem [resolvable:$true] %s1617
          %1623 = dma.vmem_to_hbm [thread:$0]  %s1618, 256, %s9, [#allocation5], 128, 128, 8
        $region84: #{forward.1} parent=55 // pred_fallthru
          _
        // Predicated region
        $region85: #{forward.1} parent=55 // pred_check
          %p1624 = pneg %p260
        $region86: #{forward.1} parent=55 // pred_check_branch
          %1626 = sbr.rel (%p1624) target = $region88
        $region87: #{forward.1} parent=55 // pred_region
          %1627 = dma.done [#allocation5], 256
        $region88: #{forward.1} parent=55 // pred_fallthru
          _
      $region56: #{forward.1} parent=5 // pred_fallthru
        _
      %p1628 = scmp.le.s32.totalorder 2, %s23
      // Predicated region
      $region89: #{forward.1} parent=5 // pred_check
        %p1629 = pneg %p1628
      $region90: #{forward.1} parent=5 // pred_check_branch
        %1631 = sbr.rel (%p1629) target = $region92
      $region91: #{forward.1} parent=5 // pred_region
        %s1632 = ssub.s32 %s23, 2
      $region92: #{forward.1} parent=5 // pred_fallthru
        _
    $region6: #{forward.1} parent=1 // loop_footer
      %s27 = sadd.s32 1, %s23
    $region7: #{forward.1} parent=1 // loop_footer_branch
      %22 = sbr.rel target = $region3
    $region8: #{forward.1} parent=1 // loop_exit
      _
    %1633 = vsyncpa [#allocation4], 1
    %s1634 = scalar_lea.sflag [#allocation4], 1
    %1635 = vsyncpa %s1634, 1
    %1636 = vsyncpa [#allocation7], 1
    %s1637 = scalar_lea.sflag [#allocation7], 1
    %1638 = vsyncpa %s1637, 1
    %1639 = vsyncpa [#allocation10], 1
    %s1640 = scalar_lea.sflag [#allocation10], 1
    %1641 = vsyncpa %s1640, 1
    %1642 = vsyncpa [#allocation5], 1
    %s1643 = scalar_lea.sflag [#allocation5], 1
    %1644 = vsyncpa %s1643, 1

</llo_original>
